<compile_context>
chip_gen: v6e
topology: v6e:2x2x1
jax: 0.10.0
libtpu: 0.0.40
codegen_flags: <defaults>
</compile_context>

<pallas_src>
import jax
import jax.numpy as jnp
from jax.experimental import pallas as pl
from jax.experimental.pallas import tpu as pltpu

NEG_SLOPE = 0.2  # LeakyReLU(0.2)


def _leaky_relu(x):
    return jnp.where(x > 0, x, NEG_SLOPE * x)


def _round_up(x, m):
    return (x + m - 1) // m * m


def cnn1d_encoder_kernel(x_ref, w1_ref, b1_ref, w2_ref, b2_ref,
                         w3_ref, b3_ref, wf_ref, bf_ref, out_ref, acc_ref):
    k = pl.program_id(1)

    @pl.when(k == 0)
    def _():
        acc_ref[...] = jnp.zeros_like(acc_ref)

    tk, BM, K1 = x_ref.shape
    # t-major rows: row r = t_local*BM + b_local  (leading-dims-only reshape,
    # free since BM % 8 == 0 and the lane dim is unchanged)
    x = x_ref[...].reshape(tk * BM, K1)                     # bf16

    # conv1: lane-dense block-diag matmul, f32 accumulate, f32 elementwise
    h = jnp.dot(x, w1_ref[...], preferred_element_type=jnp.float32)
    h = _leaky_relu(h + b1_ref[...])                        # (tk*BM, 128) f32

    # conv2
    h = jnp.dot(h.astype(jnp.bfloat16), w2_ref[...],
                preferred_element_type=jnp.float32)
    h = _leaky_relu(h + b2_ref[...])                        # (tk*BM, 128) f32

    # conv3
    h = jnp.dot(h.astype(jnp.bfloat16), w3_ref[...],
                preferred_element_type=jnp.float32)
    h = _leaky_relu(h + b3_ref[...])                        # (tk*BM, 128) f32
    h = h.astype(jnp.bfloat16)

    # fc: accumulate this time slab into the resident (BM,128) accumulator.
    # Two adjacent timesteps are lane-concatenated -> (BM,256)@(256,128),
    # filling the 256-deep MXU on v6e/v7x (neutral on v5e).
    acc = acc_ref[...]
    for p in range(tk // 2):
        h_pair = jnp.concatenate(
            [h[(2 * p) * BM:(2 * p + 1) * BM, :],
             h[(2 * p + 1) * BM:(2 * p + 2) * BM, :]], axis=-1)   # (BM, 256)
        acc = acc + jnp.dot(h_pair, wf_ref[p],
                            preferred_element_type=jnp.float32)
    acc_ref[...] = acc

    @pl.when(k == pl.num_programs(1) - 1)
    def _():
        out_ref[...] = (acc_ref[...] + bf_ref[...]).astype(out_ref.dtype)


def cnn1d_encoder(x_ncw, params, *, block_b=256, block_t=16):
    """x_ncw: (B, Cin, L) in the PyTorch NCW convention."""
    B, Cin, L = x_ncw.shape
    assert L % 8 == 0, "L must be divisible by 8 (three stride-2 convs)"
    assert block_b % 8 == 0 and block_t % 2 == 0
    T3 = L // 8
    K1 = 8 * Cin

    w1, b1 = params["conv1"]      # (32, Cin, 2), (32,)
    w2, b2 = params["conv2"]      # (64, 32, 2),  (64,)
    w3, b3 = params["conv3"]      # (128, 64, 2), (128,)
    wf, bf = params["fc"]         # (z_dim, 128*T3), (z_dim,)
    z_dim, h_dim = wf.shape
    assert h_dim == 128 * T3
    assert z_dim <= 128

    # ---- batch tiling: BM % 8 == 0 always; >= 2 parallel steps when B >= 16
    # (feeds both v7x TensorCores; negligible extra per-step cost on v5e/v6e).
    B8 = _round_up(B, 8)
    nB = max(1, -(-B8 // block_b))
    if B8 >= 16:
        nB = max(nB, 2)
    BM = _round_up(-(-B8 // nB), 8)
    B_pad = _round_up(B8, BM)
    nB = B_pad // BM

    # ---- time (reduction) tiling: even tk, prefer a divisor of T3 to avoid
    # padded work; otherwise pad T3 (padded wf slabs are zero -> no effect).
    T3e = T3 + (T3 % 2)
    tk = min(block_t, T3e)
    for cand in range(tk, 1, -2):
        if T3e % cand == 0:
            tk = cand
            break
    if tk < 8 <= T3e:
        tk = 8
    T3_pad = _round_up(T3e, tk)
    nK = T3_pad // tk

    # ---- input: NCW -> (T3_pad, B_pad, 8*Cin), one fused XLA transpose+pad ----
    x = jnp.transpose(x_ncw, (2, 0, 1))                    # (L, B, Cin)
    x = x.reshape(T3, 8, B, Cin)
    x = jnp.transpose(x, (0, 2, 1, 3)).reshape(T3, B, K1)
    x = jnp.pad(x, ((0, T3_pad - T3), (0, B_pad - B), (0, 0)))
    x = x.astype(jnp.bfloat16)

    # ---- conv weights -> block-diagonal lane-dense matmul form ----
    def conv_w_to_mat(w):          # (Cout, Cin, K=2) -> (K*Cin, Cout)
        cout, cin, kk = w.shape
        return jnp.transpose(w, (2, 1, 0)).reshape(kk * cin, cout)

    w1m = conv_w_to_mat(w1)                                        # (2*Cin, 32)
    w1blk = jnp.kron(jnp.eye(4, dtype=w1m.dtype), w1m)             # (8*Cin, 128)
    w2blk = jnp.kron(jnp.eye(2, dtype=w2.dtype), conv_w_to_mat(w2))  # (128, 128)
    w3m = conv_w_to_mat(w3)                                        # (128, 128)
    b1t = jnp.tile(b1, 4).reshape(1, 128).astype(jnp.float32)
    b2t = jnp.tile(b2, 2).reshape(1, 128).astype(jnp.float32)
    b3r = b3.reshape(1, 128).astype(jnp.float32)

    # ---- fc weight: PyTorch flatten index = c*T3 + t3 ; ours = (t3, c) ----
    wft = jnp.transpose(wf.reshape(z_dim, 128, T3), (2, 1, 0))     # (T3,128,z)
    wft = jnp.pad(wft, ((0, T3_pad - T3), (0, 0), (0, 128 - z_dim)))
    # pack two adjacent timesteps -> (T3_pad//2, 256, 128) K=256 slabs
    wfp = wft.reshape(T3_pad // 2, 2 * 128, 128)
    bfp = jnp.pad(bf, (0, 128 - z_dim)).reshape(1, 128).astype(jnp.float32)

    w1blk = w1blk.astype(jnp.bfloat16)
    w2blk = w2blk.astype(jnp.bfloat16)
    w3m = w3m.astype(jnp.bfloat16)
    wfp = wfp.astype(jnp.bfloat16)

    # ---- cost estimate ----
    flops = 2 * B_pad * T3_pad * (K1 * 128 + 3 * 128 * 128)
    bytes_accessed = (x.size * 2
                      + (w1blk.size + w2blk.size + w3m.size + wfp.size) * 2
                      + (b1t.size + b2t.size + b3r.size + bfp.size) * 4
                      + B_pad * 128 * 4)

    # ---- VMEM limit derived from the actual block footprint, per generation ----
    est_vmem = (2 * (tk * BM * K1 * 2                   # x slab (bf16, dbl-buf)
                     + (tk // 2) * 256 * 128 * 2        # wf slab (bf16, dbl-buf)
                     + (w1blk.size + w2blk.size + w3m.size) * 2
                     + 4 * 128 * 4                      # biases
                     + BM * 128 * 4)                    # output block
                + BM * 128 * 4                          # accumulator scratch
                + 3 * tk * BM * 128 * 4)                # in-kernel f32 h headroom
    try:
        kind = jax.devices()[0].device_kind.lower()
    except Exception:
        kind = ""
    vmem_cap = 48 * 1024 * 1024 if "v7" in kind else 96 * 1024 * 1024
    vmem_limit = int(min(vmem_cap, max(32 * 1024 * 1024, 2 * est_vmem)))

    out = pl.pallas_call(
        cnn1d_encoder_kernel,
        out_shape=jax.ShapeDtypeStruct((B_pad, 128), jnp.float32),
        grid=(nB, nK),
        in_specs=[
            pl.BlockSpec((tk, BM, K1), lambda i, k: (k, i, 0)),        # x slab
            pl.BlockSpec((K1, 128), lambda i, k: (0, 0)),              # w1 (resident)
            pl.BlockSpec((1, 128), lambda i, k: (0, 0)),               # b1
            pl.BlockSpec((128, 128), lambda i, k: (0, 0)),             # w2
            pl.BlockSpec((1, 128), lambda i, k: (0, 0)),               # b2
            pl.BlockSpec((128, 128), lambda i, k: (0, 0)),             # w3
            pl.BlockSpec((1, 128), lambda i, k: (0, 0)),               # b3
            pl.BlockSpec((tk // 2, 256, 128), lambda i, k: (k, 0, 0)), # wf slab
            pl.BlockSpec((1, 128), lambda i, k: (0, 0)),               # bf
        ],
        out_specs=pl.BlockSpec((BM, 128), lambda i, k: (i, 0)),
        scratch_shapes=[pltpu.VMEM((BM, 128), jnp.float32)],
        compiler_params=pltpu.CompilerParams(
            dimension_semantics=("parallel", "arbitrary"),
            vmem_limit_bytes=vmem_limit,
        ),
        cost_estimate=pl.CostEstimate(
            flops=flops, transcendentals=0, bytes_accessed=bytes_accessed),
    )(x, w1blk, b1t, w2blk, b2t, w3m, b3r, wfp, bfp)

    return out[:B, :z_dim]


if __name__ == "__main__":
    key = jax.random.PRNGKey(0)
    B, Cin, L = 2, 3, 64                    # L must be divisible by 8
    z_dim = 32
    T3 = L // 8
    h_dim = 128 * T3                        # = 1024 (Flatten output width)

    ks = jax.random.split(key, 9)

    def uinit(k, shape, fan_in):
        bound = 1.0 / (fan_in ** 0.5)       # PyTorch-style uniform init
        return jax.random.uniform(k, shape, jnp.float32, -bound, bound)

    params = {
        "conv1": (uinit(ks[0], (32, Cin, 2), Cin * 2), uinit(ks[1], (32,), Cin * 2)),
        "conv2": (uinit(ks[2], (64, 32, 2), 32 * 2),   uinit(ks[3], (64,), 32 * 2)),
        "conv3": (uinit(ks[4], (128, 64, 2), 64 * 2),  uinit(ks[5], (128,), 64 * 2)),
        "fc":    (uinit(ks[6], (z_dim, h_dim), h_dim), uinit(ks[7], (z_dim,), h_dim)),
    }
    x = jax.random.normal(ks[8], (B, Cin, L), jnp.float32)

    mu = cnn1d_encoder(x, params)
    jax.block_until_ready(mu)
    assert mu.shape == (B, z_dim) and mu.dtype == jnp.float32

    # Plain-JAX f32 reference (matches the PyTorch module exactly).
    def ref_forward(x_ncw, params):
        def conv(h, w, b):
            Bb, C, Ll = h.shape
            hp = h.reshape(Bb, C, Ll // 2, 2)
            o = jnp.einsum("bctk,ock->bot", hp, w) + b[None, :, None]
            return jnp.where(o > 0, o, NEG_SLOPE * o)
        h = conv(x_ncw, *params["conv1"])
        h = conv(h, *params["conv2"])
        h = conv(h, *params["conv3"])
        hf = h.reshape(h.shape[0], -1)      # channel-major flatten (PyTorch view)
        wf_, bf_ = params["fc"]
        return hf @ wf_.T + bf_

    ref = ref_forward(x, params)
    err = float(jnp.max(jnp.abs(mu - ref)))
    assert err < 2e-2, f"max abs error {err}"   # bf16 operands, f32 accumulation
    print("KERNEL_OK")
</pallas_src>

<mosaic_0001>
module attributes {stable_mosaic.version = 11 : i64} {
  func.func @cnn1d_encoder_kernel(%arg0: i32, %arg1: i32, %arg2: memref<8x8x24xbf16, #tpu.memory_space<vmem>>, %arg3: memref<24x128xbf16, #tpu.memory_space<vmem>>, %arg4: memref<1x128xf32, #tpu.memory_space<vmem>>, %arg5: memref<128x128xbf16, #tpu.memory_space<vmem>>, %arg6: memref<1x128xf32, #tpu.memory_space<vmem>>, %arg7: memref<128x128xbf16, #tpu.memory_space<vmem>>, %arg8: memref<1x128xf32, #tpu.memory_space<vmem>>, %arg9: memref<4x256x128xbf16, #tpu.memory_space<vmem>>, %arg10: memref<1x128xf32, #tpu.memory_space<vmem>>, %arg11: memref<8x128xf32, #tpu.memory_space<vmem>>, %arg12: memref<8x128xf32, #tpu.memory_space<vmem>>) attributes {dimension_semantics = [#tpu.dimension_semantics<parallel>, #tpu.dimension_semantics<arbitrary>], iteration_bounds = array<i64: 1, 1>, scalar_prefetch = 0 : i64, scratch_operands = 1 : i64, tpu.core_type = #tpu.core_type<tc>, window_params = [{transform_indices = @transform_0, window_bounds = array<i64: 8, 8, 24>}, {pipeline_mode = #tpu.pipeline_mode<synchronous>, transform_indices = @transform_1, window_bounds = array<i64: 24, 128>}, {pipeline_mode = #tpu.pipeline_mode<synchronous>, transform_indices = @transform_2, window_bounds = array<i64: 1, 128>}, {pipeline_mode = #tpu.pipeline_mode<synchronous>, transform_indices = @transform_3, window_bounds = array<i64: 128, 128>}, {pipeline_mode = #tpu.pipeline_mode<synchronous>, transform_indices = @transform_4, window_bounds = array<i64: 1, 128>}, {pipeline_mode = #tpu.pipeline_mode<synchronous>, transform_indices = @transform_5, window_bounds = array<i64: 128, 128>}, {pipeline_mode = #tpu.pipeline_mode<synchronous>, transform_indices = @transform_6, window_bounds = array<i64: 1, 128>}, {transform_indices = @transform_7, window_bounds = array<i64: 4, 256, 128>}, {pipeline_mode = #tpu.pipeline_mode<synchronous>, transform_indices = @transform_8, window_bounds = array<i64: 1, 128>}, {transform_indices = @transform_9, window_bounds = array<i64: 8, 128>}]} {
    %c0_i32 = arith.constant 0 : i32
    %0 = arith.cmpi eq, %arg1, %c0_i32 : i32
    %1 = arith.extui %0 : i1 to i32
    %c0_i32_0 = arith.constant 0 : i32
    %2 = arith.cmpi ne, %1, %c0_i32_0 : i32
    scf.if %2 {
      %cst_42 = arith.constant 0.000000e+00 : f32
      %71 = vector.broadcast %cst_42 : f32 to vector<8x128xf32>
      %c0_43 = arith.constant 0 : index
      %c0_44 = arith.constant 0 : index
      %72 = vector.load %arg12[%c0_43, %c0_44] : memref<8x128xf32, #tpu.memory_space<vmem>>, vector<8x128xf32>
      tpu.vector_store %arg12[%c0_43, %c0_44], %71 {strides = array<i32>} : memref<8x128xf32, #tpu.memory_space<vmem>>, vector<8x128xf32>,
    } else {
    }
    %c0 = arith.constant 0 : index
    %c0_1 = arith.constant 0 : index
    %c0_2 = arith.constant 0 : index
    %3 = vector.load %arg2[%c0, %c0_1, %c0_2] : memref<8x8x24xbf16, #tpu.memory_space<vmem>>, vector<8x8x24xbf16>
    %4 = vector.shape_cast %3 : vector<8x8x24xbf16> to vector<64x24xbf16>
    %c0_3 = arith.constant 0 : index
    %c0_4 = arith.constant 0 : index
    %5 = vector.load %arg3[%c0_3, %c0_4] : memref<24x128xbf16, #tpu.memory_space<vmem>>, vector<24x128xbf16>
    %cst = arith.constant dense<0.000000e+00> : vector<64x128xf32>
    %6 = tpu.matmul %4, %5, %cst {dimension_numbers = #tpu.dot_dimension_numbers<[1], [0], [0], [1], [0, 0, 1, 1], [], []>} : vector<64x24xbf16>, vector<24x128xbf16>, vector<64x128xf32> -> vector<64x128xf32>
    %c0_5 = arith.constant 0 : index
    %c0_6 = arith.constant 0 : index
    %7 = vector.load %arg4[%c0_5, %c0_6] : memref<1x128xf32, #tpu.memory_space<vmem>>, vector<1x128xf32>
    %8 = vector.broadcast %7 : vector<1x128xf32> to vector<64x128xf32>
    %9 = arith.addf %6, %8 : vector<64x128xf32>
    %cst_7 = arith.constant 0.000000e+00 : f32
    %10 = vector.broadcast %cst_7 : f32 to vector<64x128xf32>
    %11 = arith.cmpf ogt, %9, %10 : vector<64x128xf32>
    %cst_8 = arith.constant 2.000000e-01 : f32
    %12 = vector.broadcast %cst_8 : f32 to vector<64x128xf32>
    %13 = arith.mulf %12, %9 : vector<64x128xf32>
    %14 = arith.select %11, %9, %13 : vector<64x128xi1>, vector<64x128xf32>
    %15 = arith.truncf %14 : vector<64x128xf32> to vector<64x128xbf16>
    %c0_9 = arith.constant 0 : index
    %c0_10 = arith.constant 0 : index
    %16 = vector.load %arg5[%c0_9, %c0_10] : memref<128x128xbf16, #tpu.memory_space<vmem>>, vector<128x128xbf16>
    %cst_11 = arith.constant dense<0.000000e+00> : vector<64x128xf32>
    %17 = tpu.matmul %15, %16, %cst_11 {dimension_numbers = #tpu.dot_dimension_numbers<[1], [0], [0], [1], [0, 0, 1, 1], [], []>} : vector<64x128xbf16>, vector<128x128xbf16>, vector<64x128xf32> -> vector<64x128xf32>
    %c0_12 = arith.constant 0 : index
    %c0_13 = arith.constant 0 : index
    %18 = vector.load %arg6[%c0_12, %c0_13] : memref<1x128xf32, #tpu.memory_space<vmem>>, vector<1x128xf32>
    %19 = vector.broadcast %18 : vector<1x128xf32> to vector<64x128xf32>
    %20 = arith.addf %17, %19 : vector<64x128xf32>
    %cst_14 = arith.constant 0.000000e+00 : f32
    %21 = vector.broadcast %cst_14 : f32 to vector<64x128xf32>
    %22 = arith.cmpf ogt, %20, %21 : vector<64x128xf32>
    %cst_15 = arith.constant 2.000000e-01 : f32
    %23 = vector.broadcast %cst_15 : f32 to vector<64x128xf32>
    %24 = arith.mulf %23, %20 : vector<64x128xf32>
    %25 = arith.select %22, %20, %24 : vector<64x128xi1>, vector<64x128xf32>
    %26 = arith.truncf %25 : vector<64x128xf32> to vector<64x128xbf16>
    %c0_16 = arith.constant 0 : index
    %c0_17 = arith.constant 0 : index
    %27 = vector.load %arg7[%c0_16, %c0_17] : memref<128x128xbf16, #tpu.memory_space<vmem>>, vector<128x128xbf16>
    %cst_18 = arith.constant dense<0.000000e+00> : vector<64x128xf32>
    %28 = tpu.matmul %26, %27, %cst_18 {dimension_numbers = #tpu.dot_dimension_numbers<[1], [0], [0], [1], [0, 0, 1, 1], [], []>} : vector<64x128xbf16>, vector<128x128xbf16>, vector<64x128xf32> -> vector<64x128xf32>
    %c0_19 = arith.constant 0 : index
    %c0_20 = arith.constant 0 : index
    %29 = vector.load %arg8[%c0_19, %c0_20] : memref<1x128xf32, #tpu.memory_space<vmem>>, vector<1x128xf32>
    %30 = vector.broadcast %29 : vector<1x128xf32> to vector<64x128xf32>
    %31 = arith.addf %28, %30 : vector<64x128xf32>
    %cst_21 = arith.constant 0.000000e+00 : f32
    %32 = vector.broadcast %cst_21 : f32 to vector<64x128xf32>
    %33 = arith.cmpf ogt, %31, %32 : vector<64x128xf32>
    %cst_22 = arith.constant 2.000000e-01 : f32
    %34 = vector.broadcast %cst_22 : f32 to vector<64x128xf32>
    %35 = arith.mulf %34, %31 : vector<64x128xf32>
    %36 = arith.select %33, %31, %35 : vector<64x128xi1>, vector<64x128xf32>
    %37 = arith.truncf %36 : vector<64x128xf32> to vector<64x128xbf16>
    %c0_23 = arith.constant 0 : index
    %c0_24 = arith.constant 0 : index
    %38 = vector.load %arg12[%c0_23, %c0_24] : memref<8x128xf32, #tpu.memory_space<vmem>>, vector<8x128xf32>
    %39 = vector.extract_strided_slice %37 {offsets = [0, 0], sizes = [8, 128], strides = [1, 1]} : vector<64x128xbf16> to vector<8x128xbf16>
    %40 = vector.extract_strided_slice %37 {offsets = [8, 0], sizes = [8, 128], strides = [1, 1]} : vector<64x128xbf16> to vector<8x128xbf16>
    %41 = tpu.concatenate %39, %40 in 1 : vector<8x128xbf16>, vector<8x128xbf16> -> vector<8x256xbf16>
    %c0_25 = arith.constant 0 : index
    %c0_26 = arith.constant 0 : index
    %c0_27 = arith.constant 0 : index
    %42 = vector.load %arg9[%c0_25, %c0_26, %c0_27] : memref<4x256x128xbf16, #tpu.memory_space<vmem>>, vector<1x256x128xbf16>
    %43 = vector.shape_cast %42 : vector<1x256x128xbf16> to vector<256x128xbf16>
    %cst_28 = arith.constant dense<0.000000e+00> : vector<8x128xf32>
    %44 = tpu.matmul %41, %43, %cst_28 {dimension_numbers = #tpu.dot_dimension_numbers<[1], [0], [0], [1], [0, 0, 1, 1], [], []>} : vector<8x256xbf16>, vector<256x128xbf16>, vector<8x128xf32> -> vector<8x128xf32>
    %45 = arith.addf %38, %44 : vector<8x128xf32>
    %46 = vector.extract_strided_slice %37 {offsets = [16, 0], sizes = [8, 128], strides = [1, 1]} : vector<64x128xbf16> to vector<8x128xbf16>
    %47 = vector.extract_strided_slice %37 {offsets = [24, 0], sizes = [8, 128], strides = [1, 1]} : vector<64x128xbf16> to vector<8x128xbf16>
    %48 = tpu.concatenate %46, %47 in 1 : vector<8x128xbf16>, vector<8x128xbf16> -> vector<8x256xbf16>
    %c1 = arith.constant 1 : index
    %c0_29 = arith.constant 0 : index
    %c0_30 = arith.constant 0 : index
    %49 = vector.load %arg9[%c1, %c0_29, %c0_30] : memref<4x256x128xbf16, #tpu.memory_space<vmem>>, vector<1x256x128xbf16>
    %50 = vector.shape_cast %49 : vector<1x256x128xbf16> to vector<256x128xbf16>
    %cst_31 = arith.constant dense<0.000000e+00> : vector<8x128xf32>
    %51 = tpu.matmul %48, %50, %cst_31 {dimension_numbers = #tpu.dot_dimension_numbers<[1], [0], [0], [1], [0, 0, 1, 1], [], []>} : vector<8x256xbf16>, vector<256x128xbf16>, vector<8x128xf32> -> vector<8x128xf32>
    %52 = arith.addf %45, %51 : vector<8x128xf32>
    %53 = vector.extract_strided_slice %37 {offsets = [32, 0], sizes = [8, 128], strides = [1, 1]} : vector<64x128xbf16> to vector<8x128xbf16>
    %54 = vector.extract_strided_slice %37 {offsets = [40, 0], sizes = [8, 128], strides = [1, 1]} : vector<64x128xbf16> to vector<8x128xbf16>
    %55 = tpu.concatenate %53, %54 in 1 : vector<8x128xbf16>, vector<8x128xbf16> -> vector<8x256xbf16>
    %c2 = arith.constant 2 : index
    %c0_32 = arith.constant 0 : index
    %c0_33 = arith.constant 0 : index
    %56 = vector.load %arg9[%c2, %c0_32, %c0_33] : memref<4x256x128xbf16, #tpu.memory_space<vmem>>, vector<1x256x128xbf16>
    %57 = vector.shape_cast %56 : vector<1x256x128xbf16> to vector<256x128xbf16>
    %cst_34 = arith.constant dense<0.000000e+00> : vector<8x128xf32>
    %58 = tpu.matmul %55, %57, %cst_34 {dimension_numbers = #tpu.dot_dimension_numbers<[1], [0], [0], [1], [0, 0, 1, 1], [], []>} : vector<8x256xbf16>, vector<256x128xbf16>, vector<8x128xf32> -> vector<8x128xf32>
    %59 = arith.addf %52, %58 : vector<8x128xf32>
    %60 = vector.extract_strided_slice %37 {offsets = [48, 0], sizes = [8, 128], strides = [1, 1]} : vector<64x128xbf16> to vector<8x128xbf16>
    %61 = vector.extract_strided_slice %37 {offsets = [56, 0], sizes = [8, 128], strides = [1, 1]} : vector<64x128xbf16> to vector<8x128xbf16>
    %62 = tpu.concatenate %60, %61 in 1 : vector<8x128xbf16>, vector<8x128xbf16> -> vector<8x256xbf16>
    %c3 = arith.constant 3 : index
    %c0_35 = arith.constant 0 : index
    %c0_36 = arith.constant 0 : index
    %63 = vector.load %arg9[%c3, %c0_35, %c0_36] : memref<4x256x128xbf16, #tpu.memory_space<vmem>>, vector<1x256x128xbf16>
    %64 = vector.shape_cast %63 : vector<1x256x128xbf16> to vector<256x128xbf16>
    %cst_37 = arith.constant dense<0.000000e+00> : vector<8x128xf32>
    %65 = tpu.matmul %62, %64, %cst_37 {dimension_numbers = #tpu.dot_dimension_numbers<[1], [0], [0], [1], [0, 0, 1, 1], [], []>} : vector<8x256xbf16>, vector<256x128xbf16>, vector<8x128xf32> -> vector<8x128xf32>
    %66 = arith.addf %59, %65 : vector<8x128xf32>
    %c0_38 = arith.constant 0 : index
    %c0_39 = arith.constant 0 : index
    %67 = vector.load %arg12[%c0_38, %c0_39] : memref<8x128xf32, #tpu.memory_space<vmem>>, vector<8x128xf32>
    tpu.vector_store %arg12[%c0_38, %c0_39], %66 {strides = array<i32>} : memref<8x128xf32, #tpu.memory_space<vmem>>, vector<8x128xf32>,
    %c0_i32_40 = arith.constant 0 : i32
    %68 = arith.cmpi eq, %arg1, %c0_i32_40 : i32
    %69 = arith.extui %68 : i1 to i32
    %c0_i32_41 = arith.constant 0 : i32
    %70 = arith.cmpi ne, %69, %c0_i32_41 : i32
    scf.if %70 {
      %c0_42 = arith.constant 0 : index
      %c0_43 = arith.constant 0 : index
      %71 = vector.load %arg12[%c0_42, %c0_43] : memref<8x128xf32, #tpu.memory_space<vmem>>, vector<8x128xf32>
      %c0_44 = arith.constant 0 : index
      %c0_45 = arith.constant 0 : index
      %72 = vector.load %arg10[%c0_44, %c0_45] : memref<1x128xf32, #tpu.memory_space<vmem>>, vector<1x128xf32>
      %73 = vector.broadcast %72 : vector<1x128xf32> to vector<8x128xf32>
      %74 = arith.addf %71, %73 : vector<8x128xf32>
      %c0_46 = arith.constant 0 : index
      %c0_47 = arith.constant 0 : index
      %75 = vector.load %arg11[%c0_46, %c0_47] : memref<8x128xf32, #tpu.memory_space<vmem>>, vector<8x128xf32>
      tpu.vector_store %arg11[%c0_46, %c0_47], %74 {strides = array<i32>} : memref<8x128xf32, #tpu.memory_space<vmem>>, vector<8x128xf32>,
    } else {
    }
    return
  }
  func.func @transform_0(%arg0: i32, %arg1: i32) -> (i32, i32, i32) {
    %c0_i32 = arith.constant 0 : i32
    %c0_i32_0 = arith.constant 0 : i32
    return %arg1, %arg0, %c0_i32 : i32, i32, i32
  }
  func.func @transform_1(%arg0: i32, %arg1: i32) -> (i32, i32) {
    %c0_i32 = arith.constant 0 : i32
    %c0_i32_0 = arith.constant 0 : i32
    %c0_i32_1 = arith.constant 0 : i32
    return %c0_i32, %c0_i32_0 : i32, i32
  }
  func.func @transform_2(%arg0: i32, %arg1: i32) -> (i32, i32) {
    %c0_i32 = arith.constant 0 : i32
    %c0_i32_0 = arith.constant 0 : i32
    %c0_i32_1 = arith.constant 0 : i32
    return %c0_i32, %c0_i32_0 : i32, i32
  }
  func.func @transform_3(%arg0: i32, %arg1: i32) -> (i32, i32) {
    %c0_i32 = arith.constant 0 : i32
    %c0_i32_0 = arith.constant 0 : i32
    %c0_i32_1 = arith.constant 0 : i32
    return %c0_i32, %c0_i32_0 : i32, i32
  }
  func.func @transform_4(%arg0: i32, %arg1: i32) -> (i32, i32) {
    %c0_i32 = arith.constant 0 : i32
    %c0_i32_0 = arith.constant 0 : i32
    %c0_i32_1 = arith.constant 0 : i32
    return %c0_i32, %c0_i32_0 : i32, i32
  }
  func.func @transform_5(%arg0: i32, %arg1: i32) -> (i32, i32) {
    %c0_i32 = arith.constant 0 : i32
    %c0_i32_0 = arith.constant 0 : i32
    %c0_i32_1 = arith.constant 0 : i32
    return %c0_i32, %c0_i32_0 : i32, i32
  }
  func.func @transform_6(%arg0: i32, %arg1: i32) -> (i32, i32) {
    %c0_i32 = arith.constant 0 : i32
    %c0_i32_0 = arith.constant 0 : i32
    %c0_i32_1 = arith.constant 0 : i32
    return %c0_i32, %c0_i32_0 : i32, i32
  }
  func.func @transform_7(%arg0: i32, %arg1: i32) -> (i32, i32, i32) {
    %c0_i32 = arith.constant 0 : i32
    %c0_i32_0 = arith.constant 0 : i32
    %c0_i32_1 = arith.constant 0 : i32
    return %arg1, %c0_i32, %c0_i32_0 : i32, i32, i32
  }
  func.func @transform_8(%arg0: i32, %arg1: i32) -> (i32, i32) {
    %c0_i32 = arith.constant 0 : i32
    %c0_i32_0 = arith.constant 0 : i32
    %c0_i32_1 = arith.constant 0 : i32
    return %c0_i32, %c0_i32_0 : i32, i32
  }
  func.func @transform_9(%arg0: i32, %arg1: i32) -> (i32, i32) {
    %c0_i32 = arith.constant 0 : i32
    %c0_i32_0 = arith.constant 0 : i32
    return %arg0, %c0_i32 : i32, i32
  }
}

</mosaic_0001>

<llo_original>
// kernel: tpu_custom_call.1
$region0: #{tpu_custom_call.1}
  #allocation0 [shape = 'u32[]', space=smem, size = 0x4, offset = 0x4, fixed_abs, tag = 'smem constant byte address 0x4 - core index']
  #allocation1 [shape = 'u32[144,128]{1,0:T(1,128)}', space=vmem, size = 0x12000, scoped, tag = 'internal scratch']
  #allocation2 [shape = 'f32[8,128]{1,0:T(8,128)}', space=vmem, size = 0x1000, scoped, tag = 'scratch operand']
  %s0 = inlined_call_operand.hbm [shape: bf16[8,8,24], index: 0, kind: input, shape index: {}]
  %s1 = inlined_call_operand.hbm [shape: bf16[24,128], index: 1, kind: input, shape index: {}]
  %s2 = inlined_call_operand.vmem [shape: f32[1,128], index: 2, kind: input, shape index: {}]
  %s3 = inlined_call_operand.hbm [shape: bf16[128,128], index: 3, kind: input, shape index: {}]
  %s4 = inlined_call_operand.vmem [shape: f32[1,128], index: 4, kind: input, shape index: {}]
  %s5 = inlined_call_operand.hbm [shape: bf16[128,128], index: 5, kind: input, shape index: {}]
  %s6 = inlined_call_operand.vmem [shape: f32[1,128], index: 6, kind: input, shape index: {}]
  %s7 = inlined_call_operand.hbm [shape: bf16[4,256,128], index: 7, kind: input, shape index: {}]
  %s8 = inlined_call_operand.vmem [shape: f32[1,128], index: 8, kind: input, shape index: {}]
  %s9 = inlined_call_operand.hbm [shape: f32[8,128], index: 9, kind: output, shape index: {}]
  %s10 = sld [smem:[#allocation0]]
  $region74: #{tpu_custom_call.1} parent=0
    _
  %s12 = ssub.s32 1, %s10
  %s13 = scalar_select 0, %s12, %s10
  $region1: #{tpu_custom_call.1} parent=0
    #allocation3 [shape = 'u8[16384]{0}', space=vmem, size = 0x4000, scoped, tag = 'input window, operand 0, single buffered']
    #allocation4 [shape = 's32[1]{0}', space=sflag, size = 0x4, scoped, tag = 'scoped memory for tpu_custom_call.1']
    #allocation5 [shape = 's32[1]{0}', space=sflag, size = 0x4, scoped, tag = 'scoped memory for tpu_custom_call.1']
    #allocation6 [shape = 'u8[6144]{0}', space=vmem, size = 0x1800, scoped, tag = 'input window, operand 1, single buffered']
    #allocation7 [shape = 's32[1]{0}', space=sflag, size = 0x4, scoped, tag = 'scoped memory for tpu_custom_call.1']
    #allocation8 [shape = 'u8[32768]{0}', space=vmem, size = 0x8000, scoped, tag = 'input window, operand 3, single buffered']
    #allocation9 [shape = 'u8[32768]{0}', space=vmem, size = 0x8000, scoped, tag = 'input window, operand 5, single buffered']
    #allocation10 [shape = 's32[1]{0}', space=sflag, size = 0x4, scoped, tag = 'scoped memory for tpu_custom_call.1']
    #allocation11 [shape = 'u8[262144]{0}', space=vmem, size = 0x40000, scoped, tag = 'input window, operand 7, single buffered']
    #allocation12 [shape = 'u8[4096]{0}', space=vmem, size = 0x1000, scoped, tag = 'output window, operand 0, single buffered']
    %14 = vsyncpa [#allocation4], 0
    %15 = vsyncpa [#allocation7], 0
    %16 = vsyncpa [#allocation10], 0
    %17 = vsyncpa [#allocation5], 0
    // Predicated region
    $region2: #{tpu_custom_call.1} parent=1 // pred_check
      _
    $region3: #{tpu_custom_call.1} parent=1 // pred_check_branch
      %19 = sbr.rel (0) target = $region5
    $region4: #{tpu_custom_call.1} parent=1 // pred_region
      %s21 = ssub.s32 512, 512
      %22 = vsyncadd [#allocation4], %s21
      %s23 = sshll.u32 [#allocation3], 4
      %s24 = int_to_ptr.vmem [resolvable:$true] %s23
      %29 = dma.hbm_to_vmem [thread:$0]  %s0, 512, %s24, [#allocation4], 64, 64, 4
    $region5: #{tpu_custom_call.1} parent=1 // pred_fallthru
      _
    // Predicated region
    $region6: #{tpu_custom_call.1} parent=1 // pred_check
      _
    $region7: #{tpu_custom_call.1} parent=1 // pred_check_branch
      %31 = sbr.rel (0) target = $region9
    $region8: #{tpu_custom_call.1} parent=1 // pred_region
      %s33 = ssub.s32 192, 192
      %34 = vsyncadd [#allocation7], %s33
      %s35 = sshll.u32 [#allocation6], 4
      %s36 = int_to_ptr.vmem [resolvable:$true] %s35
      %41 = dma.hbm_to_vmem [thread:$0]  %s1, 192, %s36, [#allocation7], 64, 64, 4
    $region9: #{tpu_custom_call.1} parent=1 // pred_fallthru
      _
    // Predicated region
    $region10: #{tpu_custom_call.1} parent=1 // pred_check
      _
    $region11: #{tpu_custom_call.1} parent=1 // pred_check_branch
      %43 = sbr.rel (0) target = $region13
    $region12: #{tpu_custom_call.1} parent=1 // pred_region
      _
    $region13: #{tpu_custom_call.1} parent=1 // pred_fallthru
      _
    // Predicated region
    $region14: #{tpu_custom_call.1} parent=1 // pred_check
      _
    $region15: #{tpu_custom_call.1} parent=1 // pred_check_branch
      %45 = sbr.rel (0) target = $region17
    $region16: #{tpu_custom_call.1} parent=1 // pred_region
      %s47 = ssub.s32 1024, 1024
      %48 = vsyncadd [#allocation7], %s47
      %s49 = sshll.u32 [#allocation8], 4
      %s50 = int_to_ptr.vmem [resolvable:$true] %s49
      %55 = dma.hbm_to_vmem [thread:$0]  %s3, 1024, %s50, [#allocation7], 64, 64, 4
    $region17: #{tpu_custom_call.1} parent=1 // pred_fallthru
      _
    // Predicated region
    $region18: #{tpu_custom_call.1} parent=1 // pred_check
      _
    $region19: #{tpu_custom_call.1} parent=1 // pred_check_branch
      %57 = sbr.rel (0) target = $region21
    $region20: #{tpu_custom_call.1} parent=1 // pred_region
      _
    $region21: #{tpu_custom_call.1} parent=1 // pred_fallthru
      _
    // Predicated region
    $region22: #{tpu_custom_call.1} parent=1 // pred_check
      _
    $region23: #{tpu_custom_call.1} parent=1 // pred_check_branch
      %59 = sbr.rel (0) target = $region25
    $region24: #{tpu_custom_call.1} parent=1 // pred_region
      %s61 = ssub.s32 1024, 1024
      %62 = vsyncadd [#allocation10], %s61
      %s63 = sshll.u32 [#allocation9], 4
      %s64 = int_to_ptr.vmem [resolvable:$true] %s63
      %69 = dma.hbm_to_vmem [thread:$0]  %s5, 1024, %s64, [#allocation10], 64, 64, 4
    $region25: #{tpu_custom_call.1} parent=1 // pred_fallthru
      _
    // Predicated region
    $region26: #{tpu_custom_call.1} parent=1 // pred_check
      _
    $region27: #{tpu_custom_call.1} parent=1 // pred_check_branch
      %71 = sbr.rel (0) target = $region29
    $region28: #{tpu_custom_call.1} parent=1 // pred_region
      _
    $region29: #{tpu_custom_call.1} parent=1 // pred_fallthru
      _
    // Predicated region
    $region30: #{tpu_custom_call.1} parent=1 // pred_check
      _
    $region31: #{tpu_custom_call.1} parent=1 // pred_check_branch
      %73 = sbr.rel (0) target = $region33
    $region32: #{tpu_custom_call.1} parent=1 // pred_region
      %s75 = ssub.s32 8192, 8192
      %76 = vsyncadd [#allocation10], %s75
      %s77 = sshll.u32 [#allocation11], 4
      %s78 = int_to_ptr.vmem [resolvable:$true] %s77
      %83 = dma.hbm_to_vmem [thread:$0]  %s7, 8192, %s78, [#allocation10], 64, 64, 4
    $region33: #{tpu_custom_call.1} parent=1 // pred_fallthru
      _
    // Predicated region
    $region34: #{tpu_custom_call.1} parent=1 // pred_check
      _
    $region35: #{tpu_custom_call.1} parent=1 // pred_check_branch
      %85 = sbr.rel (0) target = $region37
    $region36: #{tpu_custom_call.1} parent=1 // pred_region
      _
    $region37: #{tpu_custom_call.1} parent=1 // pred_fallthru
      _
    // Predicated region
    $region38: #{tpu_custom_call.1} parent=1 // pred_check
      _
    $region39: #{tpu_custom_call.1} parent=1 // pred_check_branch
      %87 = sbr.rel (0) target = $region41
    $region40: #{tpu_custom_call.1} parent=1 // pred_region
      %88 = dma.done [#allocation4], 512
    $region41: #{tpu_custom_call.1} parent=1 // pred_fallthru
      _
    // Predicated region
    $region42: #{tpu_custom_call.1} parent=1 // pred_check
      _
    $region43: #{tpu_custom_call.1} parent=1 // pred_check_branch
      %90 = sbr.rel (0) target = $region45
    $region44: #{tpu_custom_call.1} parent=1 // pred_region
      %91 = dma.done [#allocation7], 192
    $region45: #{tpu_custom_call.1} parent=1 // pred_fallthru
      _
    // Predicated region
    $region46: #{tpu_custom_call.1} parent=1 // pred_check
      _
    $region47: #{tpu_custom_call.1} parent=1 // pred_check_branch
      %93 = sbr.rel (0) target = $region49
    $region48: #{tpu_custom_call.1} parent=1 // pred_region
      %94 = dma.done [#allocation7], 1024
    $region49: #{tpu_custom_call.1} parent=1 // pred_fallthru
      _
    // Predicated region
    $region50: #{tpu_custom_call.1} parent=1 // pred_check
      _
    $region51: #{tpu_custom_call.1} parent=1 // pred_check_branch
      %96 = sbr.rel (0) target = $region53
    $region52: #{tpu_custom_call.1} parent=1 // pred_region
      %97 = dma.done [#allocation10], 1024
    $region53: #{tpu_custom_call.1} parent=1 // pred_fallthru
      _
    // Predicated region
    $region54: #{tpu_custom_call.1} parent=1 // pred_check
      _
    $region55: #{tpu_custom_call.1} parent=1 // pred_check_branch
      %99 = sbr.rel (0) target = $region57
    $region56: #{tpu_custom_call.1} parent=1 // pred_region
      %100 = dma.done [#allocation10], 8192
    $region57: #{tpu_custom_call.1} parent=1 // pred_fallthru
      _
    %p102 = scmp.eq.s32.totalorder 0, 0
    // Predicated region
    $region58: #{tpu_custom_call.1} parent=1 // pred_check
      %p103 = pneg %p102
    $region59: #{tpu_custom_call.1} parent=1 // pred_check_branch
      %105 = sbr.rel (%p103) target = $region61
    $region60: #{tpu_custom_call.1} parent=1 // pred_region
      %106 = vst [vmem:[#allocation2] sm:$0xff] 0.0
    $region61: #{tpu_custom_call.1} parent=1 // pred_fallthru
      _
    %v107 = vld [vmem:[#allocation3] sm:$0xf]
    %v108 = vld [vmem:[#allocation3 + $0x4] sm:$0xf]
    %v109 = vld [vmem:[#allocation3 + $0x8] sm:$0xf]
    %v110 = vld [vmem:[#allocation3 + $0xc] sm:$0xf]
    %v111 = vld [vmem:[#allocation3 + $0x10] sm:$0xf]
    %v112 = vld [vmem:[#allocation3 + $0x14] sm:$0xf]
    %v113 = vld [vmem:[#allocation3 + $0x18] sm:$0xf]
    %v114 = vld [vmem:[#allocation3 + $0x1c] sm:$0xf]
    %v115 = vld [vmem:[#allocation6] sm:$0xf]
    %v116 = vld [vmem:[#allocation6 + $0x4] sm:$0xf]
    %v117 = vld [vmem:[#allocation6 + $0x8] sm:$0xf]
    %v118 = vld [vmem:[%s2] sm:$0x1]
    %v120 = vlaneseq
    %v121 = vshrl.u32 %v120, 7
    %v122 = vsub.s32 0, %v121
    %v123 = vrot.slane %v118, %v122
    %v133 = vunpack.c.l.b16 %v107
    %v134 = vunpack.c.l.b16 %v108
    %v135 = vunpack.c.l.b16 %v109
    %v136 = vunpack.c.l.b16 %v110
    %v137 = vunpack.c.l.b16 %v111
    %v138 = vunpack.c.l.b16 %v112
    %v139 = vunpack.c.l.b16 %v113
    %v140 = vunpack.c.l.b16 %v114
    %v141 = vpack.c.b16 %v134, %v133
    %v142 = vpack.c.b16 %v136, %v135
    %v143 = vpack.c.b16 %v138, %v137
    %v144 = vpack.c.b16 %v140, %v139
    %v148 = vunpack.c.l.b16 %v115
    %v149 = vunpack.c.l.b16 %v116
    %v150 = vunpack.c.l.b16 %v117
    %v151 = vpack.c.b16 %v149, %v148
    %v152 = vpack.c.b16 %v150, %v150
    %vm154 = vcmask 195584
    %v156 = vsel %vm154, %v141, 0
    %v159 = vsel %vm154, %v142, 0
    %v162 = vsel %vm154, %v143, 0
    %v165 = vsel %vm154, %v144, 0
    %vm167 = vcmask 1043456
    %v169 = vsel %vm167, %v152, 0
    %171 = vmatprep.subr.bf16.mxu0 0
    %172 = vmatpush1.bf16.msra.mxu0 0
    %173 = vmatprep.subr.bf16.mxu0 0
    %174 = vmatpush1.bf16.msra.mxu0 0
    %175 = vmatprep.subr.bf16.mxu0 0
    %176 = vmatpush1.bf16.msra.mxu0 0
    %177 = vmatprep.subr.bf16.mxu0 0
    %178 = vmatpush1.bf16.msra.mxu0 0
    %179 = vmatprep.subr.bf16.mxu0 0
    %180 = vmatpush1.bf16.msra.mxu0 0
    %181 = vmatprep.subr.bf16.mxu0 0
    %182 = vmatpush1.bf16.msra.mxu0 0
    %183 = vmatprep.subr.bf16.mxu0 0
    %184 = vmatpush1.bf16.msra.mxu0 %v169
    %185 = vmatprep.subr.bf16.mxu0 0
    %186 = vmatpush1.bf16.msra.mxu0 %v151
    %187 = vmatprep.subr.bf16.mxu0 0
    %188 = vmatpush2.bf16.msra.mxu0 0
    %189 = vmatprep.subr.bf16.mxu0 0
    %190 = vmatpush2.bf16.msra.mxu0 0
    %191 = vmatprep.subr.bf16.mxu0 0
    %192 = vmatpush2.bf16.msra.mxu0 0
    %193 = vmatprep.subr.bf16.mxu0 0
    %194 = vmatpush2.bf16.msra.mxu0 0
    %195 = vmatprep.subr.bf16.mxu0 0
    %196 = vmatpush2.bf16.msra.mxu0 0
    %197 = vmatprep.subr.bf16.mxu0 0
    %198 = vmatpush2.bf16.msra.mxu0 0
    %199 = vmatprep.subr.bf16.mxu0 0
    %200 = vmatpush2.bf16.msra.mxu0 0
    %201 = vmatprep.subr.bf16.mxu0 0
    %202 = vmatpush2.bf16.msra.mxu0 0
    %203 = vmatprep.mubr.bf16.mxu0 0
    %204 = vmatmul.mubr.bf16.gmra.mxu0 %v156
    %v205 = vpop.f32.mrf.mxu0
    %v206 = vadd.f32 %v123, %v205
    %v207 = vpop.f32.mrf.mxu0
    %v208 = vpop.f32.mrf.mxu0
    %v209 = vadd.f32 %v123, %v208
    %v210 = vpop.f32.mrf.mxu0
    %211 = vmatprep.mubr.bf16.mxu0 0
    %212 = vmatmul.mubr.bf16.gmra.mxu0 %v159
    %v213 = vpop.f32.mrf.mxu0
    %v214 = vadd.f32 %v123, %v213
    %v215 = vpop.f32.mrf.mxu0
    %v216 = vpop.f32.mrf.mxu0
    %v217 = vadd.f32 %v123, %v216
    %v218 = vpop.f32.mrf.mxu0
    %219 = vmatprep.mubr.bf16.mxu0 0
    %220 = vmatmul.mubr.bf16.gmra.mxu0 %v162
    %v221 = vpop.f32.mrf.mxu0
    %v222 = vadd.f32 %v123, %v221
    %v223 = vpop.f32.mrf.mxu0
    %v224 = vpop.f32.mrf.mxu0
    %v225 = vadd.f32 %v123, %v224
    %v226 = vpop.f32.mrf.mxu0
    %227 = vmatprep.mubr.bf16.mxu0 0
    %228 = vmatmul.mubr.bf16.gmra.mxu0 %v165
    %v229 = vpop.f32.mrf.mxu0
    %v230 = vadd.f32 %v123, %v229
    %v231 = vpop.f32.mrf.mxu0
    %v232 = vpop.f32.mrf.mxu0
    %v233 = vadd.f32 %v123, %v232
    %v234 = vpop.f32.mrf.mxu0
    %235 = vdwg.mxu0
    %vm236 = vcmp.gt.f32.partialorder %v206, 0.0
    %vm237 = vcmp.gt.f32.partialorder %v209, 0.0
    %vm238 = vcmp.gt.f32.partialorder %v214, 0.0
    %vm239 = vcmp.gt.f32.partialorder %v217, 0.0
    %vm240 = vcmp.gt.f32.partialorder %v222, 0.0
    %vm241 = vcmp.gt.f32.partialorder %v225, 0.0
    %vm242 = vcmp.gt.f32.partialorder %v230, 0.0
    %vm243 = vcmp.gt.f32.partialorder %v233, 0.0
    %v244 = vmul.f32 %v206, 0.2
    %v245 = vmul.f32 %v209, 0.2
    %v246 = vmul.f32 %v214, 0.2
    %v247 = vmul.f32 %v217, 0.2
    %v248 = vmul.f32 %v222, 0.2
    %v249 = vmul.f32 %v225, 0.2
    %v250 = vmul.f32 %v230, 0.2
    %v251 = vmul.f32 %v233, 0.2
    %v252 = vsel %vm236, %v206, %v244
    %v253 = vsel %vm237, %v209, %v245
    %v254 = vsel %vm238, %v214, %v246
    %v255 = vsel %vm239, %v217, %v247
    %v256 = vsel %vm240, %v222, %v248
    %v257 = vsel %vm241, %v225, %v249
    %v258 = vsel %vm242, %v230, %v250
    %v259 = vsel %vm243, %v233, %v251
    %v260 = vpack.c.bf16 %v253, %v252
    %v261 = vpack.c.bf16 %v255, %v254
    %v262 = vpack.c.bf16 %v257, %v256
    %v263 = vpack.c.bf16 %v259, %v258
    %v264 = vld [vmem:[#allocation8] sm:$0xf]
    %v265 = vld [vmem:[#allocation8 + $0x4] sm:$0xf]
    %v266 = vld [vmem:[#allocation8 + $0x8] sm:$0xf]
    %v267 = vld [vmem:[#allocation8 + $0xc] sm:$0xf]
    %v268 = vld [vmem:[#allocation8 + $0x10] sm:$0xf]
    %v269 = vld [vmem:[#allocation8 + $0x14] sm:$0xf]
    %v270 = vld [vmem:[#allocation8 + $0x18] sm:$0xf]
    %v271 = vld [vmem:[#allocation8 + $0x1c] sm:$0xf]
    %v272 = vld [vmem:[#allocation8 + $0x20] sm:$0xf]
    %v273 = vld [vmem:[#allocation8 + $0x24] sm:$0xf]
    %v274 = vld [vmem:[#allocation8 + $0x28] sm:$0xf]
    %v275 = vld [vmem:[#allocation8 + $0x2c] sm:$0xf]
    %v276 = vld [vmem:[#allocation8 + $0x30] sm:$0xf]
    %v277 = vld [vmem:[#allocation8 + $0x34] sm:$0xf]
    %v278 = vld [vmem:[#allocation8 + $0x38] sm:$0xf]
    %v279 = vld [vmem:[#allocation8 + $0x3c] sm:$0xf]
    %v280 = vld [vmem:[%s4] sm:$0x1]
    %v282 = vlaneseq
    %v283 = vshrl.u32 %v282, 7
    %v284 = vsub.s32 0, %v283
    %v285 = vrot.slane %v280, %v284
    %v303 = vunpack.c.l.b16 %v264
    %v304 = vunpack.c.l.b16 %v265
    %v305 = vunpack.c.l.b16 %v266
    %v306 = vunpack.c.l.b16 %v267
    %v307 = vunpack.c.l.b16 %v268
    %v308 = vunpack.c.l.b16 %v269
    %v309 = vunpack.c.l.b16 %v270
    %v310 = vunpack.c.l.b16 %v271
    %v311 = vunpack.c.l.b16 %v272
    %v312 = vunpack.c.l.b16 %v273
    %v313 = vunpack.c.l.b16 %v274
    %v314 = vunpack.c.l.b16 %v275
    %v315 = vunpack.c.l.b16 %v276
    %v316 = vunpack.c.l.b16 %v277
    %v317 = vunpack.c.l.b16 %v278
    %v318 = vunpack.c.l.b16 %v279
    %v319 = vpack.c.b16 %v304, %v303
    %v320 = vpack.c.b16 %v306, %v305
    %v321 = vpack.c.b16 %v308, %v307
    %v322 = vpack.c.b16 %v310, %v309
    %v323 = vpack.c.b16 %v312, %v311
    %v324 = vpack.c.b16 %v314, %v313
    %v325 = vpack.c.b16 %v316, %v315
    %v326 = vpack.c.b16 %v318, %v317
    %335 = vmatprep.subr.bf16.mxu0 0
    %336 = vmatpush1.bf16.msra.mxu0 %v326
    %337 = vmatprep.subr.bf16.mxu0 0
    %338 = vmatpush1.bf16.msra.mxu0 %v325
    %339 = vmatprep.subr.bf16.mxu0 0
    %340 = vmatpush1.bf16.msra.mxu0 %v324
    %341 = vmatprep.subr.bf16.mxu0 0
    %342 = vmatpush1.bf16.msra.mxu0 %v323
    %343 = vmatprep.subr.bf16.mxu0 0
    %344 = vmatpush1.bf16.msra.mxu0 %v322
    %345 = vmatprep.subr.bf16.mxu0 0
    %346 = vmatpush1.bf16.msra.mxu0 %v321
    %347 = vmatprep.subr.bf16.mxu0 0
    %348 = vmatpush1.bf16.msra.mxu0 %v320
    %349 = vmatprep.subr.bf16.mxu0 0
    %350 = vmatpush1.bf16.msra.mxu0 %v319
    %351 = vmatprep.subr.bf16.mxu0 0
    %352 = vmatpush2.bf16.msra.mxu0 0
    %353 = vmatprep.subr.bf16.mxu0 0
    %354 = vmatpush2.bf16.msra.mxu0 0
    %355 = vmatprep.subr.bf16.mxu0 0
    %356 = vmatpush2.bf16.msra.mxu0 0
    %357 = vmatprep.subr.bf16.mxu0 0
    %358 = vmatpush2.bf16.msra.mxu0 0
    %359 = vmatprep.subr.bf16.mxu0 0
    %360 = vmatpush2.bf16.msra.mxu0 0
    %361 = vmatprep.subr.bf16.mxu0 0
    %362 = vmatpush2.bf16.msra.mxu0 0
    %363 = vmatprep.subr.bf16.mxu0 0
    %364 = vmatpush2.bf16.msra.mxu0 0
    %365 = vmatprep.subr.bf16.mxu0 0
    %366 = vmatpush2.bf16.msra.mxu0 0
    %367 = vmatprep.mubr.bf16.mxu0 0
    %368 = vmatmul.mubr.bf16.gmra.mxu0 %v260
    %v369 = vpop.f32.mrf.mxu0
    %v370 = vadd.f32 %v285, %v369
    %v371 = vpop.f32.mrf.mxu0
    %v372 = vpop.f32.mrf.mxu0
    %v373 = vadd.f32 %v285, %v372
    %v374 = vpop.f32.mrf.mxu0
    %375 = vmatprep.mubr.bf16.mxu0 0
    %376 = vmatmul.mubr.bf16.gmra.mxu0 %v261
    %v377 = vpop.f32.mrf.mxu0
    %v378 = vadd.f32 %v285, %v377
    %v379 = vpop.f32.mrf.mxu0
    %v380 = vpop.f32.mrf.mxu0
    %v381 = vadd.f32 %v285, %v380
    %v382 = vpop.f32.mrf.mxu0
    %383 = vmatprep.mubr.bf16.mxu0 0
    %384 = vmatmul.mubr.bf16.gmra.mxu0 %v262
    %v385 = vpop.f32.mrf.mxu0
    %v386 = vadd.f32 %v285, %v385
    %v387 = vpop.f32.mrf.mxu0
    %v388 = vpop.f32.mrf.mxu0
    %v389 = vadd.f32 %v285, %v388
    %v390 = vpop.f32.mrf.mxu0
    %391 = vmatprep.mubr.bf16.mxu0 0
    %392 = vmatmul.mubr.bf16.gmra.mxu0 %v263
    %v393 = vpop.f32.mrf.mxu0
    %v394 = vadd.f32 %v285, %v393
    %v395 = vpop.f32.mrf.mxu0
    %v396 = vpop.f32.mrf.mxu0
    %v397 = vadd.f32 %v285, %v396
    %v398 = vpop.f32.mrf.mxu0
    %399 = vdwg.mxu0
    %vm400 = vcmp.gt.f32.partialorder %v370, 0.0
    %vm401 = vcmp.gt.f32.partialorder %v373, 0.0
    %vm402 = vcmp.gt.f32.partialorder %v378, 0.0
    %vm403 = vcmp.gt.f32.partialorder %v381, 0.0
    %vm404 = vcmp.gt.f32.partialorder %v386, 0.0
    %vm405 = vcmp.gt.f32.partialorder %v389, 0.0
    %vm406 = vcmp.gt.f32.partialorder %v394, 0.0
    %vm407 = vcmp.gt.f32.partialorder %v397, 0.0
    %v408 = vmul.f32 %v370, 0.2
    %v409 = vmul.f32 %v373, 0.2
    %v410 = vmul.f32 %v378, 0.2
    %v411 = vmul.f32 %v381, 0.2
    %v412 = vmul.f32 %v386, 0.2
    %v413 = vmul.f32 %v389, 0.2
    %v414 = vmul.f32 %v394, 0.2
    %v415 = vmul.f32 %v397, 0.2
    %v416 = vsel %vm400, %v370, %v408
    %v417 = vsel %vm401, %v373, %v409
    %v418 = vsel %vm402, %v378, %v410
    %v419 = vsel %vm403, %v381, %v411
    %v420 = vsel %vm404, %v386, %v412
    %v421 = vsel %vm405, %v389, %v413
    %v422 = vsel %vm406, %v394, %v414
    %v423 = vsel %vm407, %v397, %v415
    %v424 = vpack.c.bf16 %v417, %v416
    %v425 = vpack.c.bf16 %v419, %v418
    %v426 = vpack.c.bf16 %v421, %v420
    %v427 = vpack.c.bf16 %v423, %v422
    %v428 = vld [vmem:[#allocation9] sm:$0xf]
    %v429 = vld [vmem:[#allocation9 + $0x4] sm:$0xf]
    %v430 = vld [vmem:[#allocation9 + $0x8] sm:$0xf]
    %v431 = vld [vmem:[#allocation9 + $0xc] sm:$0xf]
    %v432 = vld [vmem:[#allocation9 + $0x10] sm:$0xf]
    %v433 = vld [vmem:[#allocation9 + $0x14] sm:$0xf]
    %v434 = vld [vmem:[#allocation9 + $0x18] sm:$0xf]
    %v435 = vld [vmem:[#allocation9 + $0x1c] sm:$0xf]
    %v436 = vld [vmem:[#allocation9 + $0x20] sm:$0xf]
    %v437 = vld [vmem:[#allocation9 + $0x24] sm:$0xf]
    %v438 = vld [vmem:[#allocation9 + $0x28] sm:$0xf]
    %v439 = vld [vmem:[#allocation9 + $0x2c] sm:$0xf]
    %v440 = vld [vmem:[#allocation9 + $0x30] sm:$0xf]
    %v441 = vld [vmem:[#allocation9 + $0x34] sm:$0xf]
    %v442 = vld [vmem:[#allocation9 + $0x38] sm:$0xf]
    %v443 = vld [vmem:[#allocation9 + $0x3c] sm:$0xf]
    %v444 = vld [vmem:[%s6] sm:$0x1]
    %v446 = vlaneseq
    %v447 = vshrl.u32 %v446, 7
    %v448 = vsub.s32 0, %v447
    %v449 = vrot.slane %v444, %v448
    %v467 = vunpack.c.l.b16 %v428
    %v468 = vunpack.c.l.b16 %v429
    %v469 = vunpack.c.l.b16 %v430
    %v470 = vunpack.c.l.b16 %v431
    %v471 = vunpack.c.l.b16 %v432
    %v472 = vunpack.c.l.b16 %v433
    %v473 = vunpack.c.l.b16 %v434
    %v474 = vunpack.c.l.b16 %v435
    %v475 = vunpack.c.l.b16 %v436
    %v476 = vunpack.c.l.b16 %v437
    %v477 = vunpack.c.l.b16 %v438
    %v478 = vunpack.c.l.b16 %v439
    %v479 = vunpack.c.l.b16 %v440
    %v480 = vunpack.c.l.b16 %v441
    %v481 = vunpack.c.l.b16 %v442
    %v482 = vunpack.c.l.b16 %v443
    %v483 = vpack.c.b16 %v468, %v467
    %v484 = vpack.c.b16 %v470, %v469
    %v485 = vpack.c.b16 %v472, %v471
    %v486 = vpack.c.b16 %v474, %v473
    %v487 = vpack.c.b16 %v476, %v475
    %v488 = vpack.c.b16 %v478, %v477
    %v489 = vpack.c.b16 %v480, %v479
    %v490 = vpack.c.b16 %v482, %v481
    %499 = vmatprep.subr.bf16.mxu0 0
    %500 = vmatpush1.bf16.msra.mxu0 %v490
    %501 = vmatprep.subr.bf16.mxu0 0
    %502 = vmatpush1.bf16.msra.mxu0 %v489
    %503 = vmatprep.subr.bf16.mxu0 0
    %504 = vmatpush1.bf16.msra.mxu0 %v488
    %505 = vmatprep.subr.bf16.mxu0 0
    %506 = vmatpush1.bf16.msra.mxu0 %v487
    %507 = vmatprep.subr.bf16.mxu0 0
    %508 = vmatpush1.bf16.msra.mxu0 %v486
    %509 = vmatprep.subr.bf16.mxu0 0
    %510 = vmatpush1.bf16.msra.mxu0 %v485
    %511 = vmatprep.subr.bf16.mxu0 0
    %512 = vmatpush1.bf16.msra.mxu0 %v484
    %513 = vmatprep.subr.bf16.mxu0 0
    %514 = vmatpush1.bf16.msra.mxu0 %v483
    %515 = vmatprep.subr.bf16.mxu0 0
    %516 = vmatpush2.bf16.msra.mxu0 0
    %517 = vmatprep.subr.bf16.mxu0 0
    %518 = vmatpush2.bf16.msra.mxu0 0
    %519 = vmatprep.subr.bf16.mxu0 0
    %520 = vmatpush2.bf16.msra.mxu0 0
    %521 = vmatprep.subr.bf16.mxu0 0
    %522 = vmatpush2.bf16.msra.mxu0 0
    %523 = vmatprep.subr.bf16.mxu0 0
    %524 = vmatpush2.bf16.msra.mxu0 0
    %525 = vmatprep.subr.bf16.mxu0 0
    %526 = vmatpush2.bf16.msra.mxu0 0
    %527 = vmatprep.subr.bf16.mxu0 0
    %528 = vmatpush2.bf16.msra.mxu0 0
    %529 = vmatprep.subr.bf16.mxu0 0
    %530 = vmatpush2.bf16.msra.mxu0 0
    %531 = vmatprep.mubr.bf16.mxu0 0
    %532 = vmatmul.mubr.bf16.gmra.mxu0 %v424
    %v533 = vpop.f32.mrf.mxu0
    %v534 = vadd.f32 %v449, %v533
    %v535 = vpop.f32.mrf.mxu0
    %v536 = vpop.f32.mrf.mxu0
    %v537 = vadd.f32 %v449, %v536
    %v538 = vpop.f32.mrf.mxu0
    %539 = vmatprep.mubr.bf16.mxu0 0
    %540 = vmatmul.mubr.bf16.gmra.mxu0 %v425
    %v541 = vpop.f32.mrf.mxu0
    %v542 = vadd.f32 %v449, %v541
    %v543 = vpop.f32.mrf.mxu0
    %v544 = vpop.f32.mrf.mxu0
    %v545 = vadd.f32 %v449, %v544
    %v546 = vpop.f32.mrf.mxu0
    %547 = vmatprep.mubr.bf16.mxu0 0
    %548 = vmatmul.mubr.bf16.gmra.mxu0 %v426
    %v549 = vpop.f32.mrf.mxu0
    %v550 = vadd.f32 %v449, %v549
    %v551 = vpop.f32.mrf.mxu0
    %v552 = vpop.f32.mrf.mxu0
    %v553 = vadd.f32 %v449, %v552
    %v554 = vpop.f32.mrf.mxu0
    %555 = vmatprep.mubr.bf16.mxu0 0
    %556 = vmatmul.mubr.bf16.gmra.mxu0 %v427
    %v557 = vpop.f32.mrf.mxu0
    %v558 = vadd.f32 %v449, %v557
    %v559 = vpop.f32.mrf.mxu0
    %v560 = vpop.f32.mrf.mxu0
    %v561 = vadd.f32 %v449, %v560
    %v562 = vpop.f32.mrf.mxu0
    %563 = vdwg.mxu0
    %vm564 = vcmp.gt.f32.partialorder %v534, 0.0
    %vm565 = vcmp.gt.f32.partialorder %v537, 0.0
    %vm566 = vcmp.gt.f32.partialorder %v542, 0.0
    %vm567 = vcmp.gt.f32.partialorder %v545, 0.0
    %vm568 = vcmp.gt.f32.partialorder %v550, 0.0
    %vm569 = vcmp.gt.f32.partialorder %v553, 0.0
    %vm570 = vcmp.gt.f32.partialorder %v558, 0.0
    %vm571 = vcmp.gt.f32.partialorder %v561, 0.0
    %v572 = vmul.f32 %v534, 0.2
    %v573 = vmul.f32 %v537, 0.2
    %v574 = vmul.f32 %v542, 0.2
    %v575 = vmul.f32 %v545, 0.2
    %v576 = vmul.f32 %v550, 0.2
    %v577 = vmul.f32 %v553, 0.2
    %v578 = vmul.f32 %v558, 0.2
    %v579 = vmul.f32 %v561, 0.2
    %v580 = vsel %vm564, %v534, %v572
    %v581 = vsel %vm565, %v537, %v573
    %v582 = vsel %vm566, %v542, %v574
    %v583 = vsel %vm567, %v545, %v575
    %v584 = vsel %vm568, %v550, %v576
    %v585 = vsel %vm569, %v553, %v577
    %v586 = vsel %vm570, %v558, %v578
    %v587 = vsel %vm571, %v561, %v579
    %v588 = vpack.c.bf16 %v581, %v580
    %v589 = vpack.c.bf16 %v583, %v582
    %v590 = vpack.c.bf16 %v585, %v584
    %v591 = vpack.c.bf16 %v587, %v586
    %v592 = vld [vmem:[#allocation2] sm:$0xff]
    %v594 = vrot.slane %v588, 4
    %v596 = vld [vmem:[#allocation11] sm:$0xf]
    %v597 = vld [vmem:[#allocation11 + $0x4] sm:$0xf]
    %v598 = vld [vmem:[#allocation11 + $0x8] sm:$0xf]
    %v599 = vld [vmem:[#allocation11 + $0xc] sm:$0xf]
    %v600 = vld [vmem:[#allocation11 + $0x10] sm:$0xf]
    %v601 = vld [vmem:[#allocation11 + $0x14] sm:$0xf]
    %v602 = vld [vmem:[#allocation11 + $0x18] sm:$0xf]
    %v603 = vld [vmem:[#allocation11 + $0x1c] sm:$0xf]
    %v604 = vld [vmem:[#allocation11 + $0x20] sm:$0xf]
    %v605 = vld [vmem:[#allocation11 + $0x24] sm:$0xf]
    %v606 = vld [vmem:[#allocation11 + $0x28] sm:$0xf]
    %v607 = vld [vmem:[#allocation11 + $0x2c] sm:$0xf]
    %v608 = vld [vmem:[#allocation11 + $0x30] sm:$0xf]
    %v609 = vld [vmem:[#allocation11 + $0x34] sm:$0xf]
    %v610 = vld [vmem:[#allocation11 + $0x38] sm:$0xf]
    %v611 = vld [vmem:[#allocation11 + $0x3c] sm:$0xf]
    %v612 = vld [vmem:[#allocation11 + $0x40] sm:$0xf]
    %v613 = vld [vmem:[#allocation11 + $0x44] sm:$0xf]
    %v614 = vld [vmem:[#allocation11 + $0x48] sm:$0xf]
    %v615 = vld [vmem:[#allocation11 + $0x4c] sm:$0xf]
    %v616 = vld [vmem:[#allocation11 + $0x50] sm:$0xf]
    %v617 = vld [vmem:[#allocation11 + $0x54] sm:$0xf]
    %v618 = vld [vmem:[#allocation11 + $0x58] sm:$0xf]
    %v619 = vld [vmem:[#allocation11 + $0x5c] sm:$0xf]
    %v620 = vld [vmem:[#allocation11 + $0x60] sm:$0xf]
    %v621 = vld [vmem:[#allocation11 + $0x64] sm:$0xf]
    %v622 = vld [vmem:[#allocation11 + $0x68] sm:$0xf]
    %v623 = vld [vmem:[#allocation11 + $0x6c] sm:$0xf]
    %v624 = vld [vmem:[#allocation11 + $0x70] sm:$0xf]
    %v625 = vld [vmem:[#allocation11 + $0x74] sm:$0xf]
    %v626 = vld [vmem:[#allocation11 + $0x78] sm:$0xf]
    %v627 = vld [vmem:[#allocation11 + $0x7c] sm:$0xf]
    %v660 = vunpack.c.l.b16 %v596
    %v661 = vunpack.c.l.b16 %v597
    %v662 = vunpack.c.l.b16 %v598
    %v663 = vunpack.c.l.b16 %v599
    %v664 = vunpack.c.l.b16 %v600
    %v665 = vunpack.c.l.b16 %v601
    %v666 = vunpack.c.l.b16 %v602
    %v667 = vunpack.c.l.b16 %v603
    %v668 = vunpack.c.l.b16 %v604
    %v669 = vunpack.c.l.b16 %v605
    %v670 = vunpack.c.l.b16 %v606
    %v671 = vunpack.c.l.b16 %v607
    %v672 = vunpack.c.l.b16 %v608
    %v673 = vunpack.c.l.b16 %v609
    %v674 = vunpack.c.l.b16 %v610
    %v675 = vunpack.c.l.b16 %v611
    %v676 = vunpack.c.l.b16 %v612
    %v677 = vunpack.c.l.b16 %v613
    %v678 = vunpack.c.l.b16 %v614
    %v679 = vunpack.c.l.b16 %v615
    %v680 = vunpack.c.l.b16 %v616
    %v681 = vunpack.c.l.b16 %v617
    %v682 = vunpack.c.l.b16 %v618
    %v683 = vunpack.c.l.b16 %v619
    %v684 = vunpack.c.l.b16 %v620
    %v685 = vunpack.c.l.b16 %v621
    %v686 = vunpack.c.l.b16 %v622
    %v687 = vunpack.c.l.b16 %v623
    %v688 = vunpack.c.l.b16 %v624
    %v689 = vunpack.c.l.b16 %v625
    %v690 = vunpack.c.l.b16 %v626
    %v691 = vunpack.c.l.b16 %v627
    %v692 = vpack.c.b16 %v661, %v660
    %v693 = vpack.c.b16 %v663, %v662
    %v694 = vpack.c.b16 %v665, %v664
    %v695 = vpack.c.b16 %v667, %v666
    %v696 = vpack.c.b16 %v669, %v668
    %v697 = vpack.c.b16 %v671, %v670
    %v698 = vpack.c.b16 %v673, %v672
    %v699 = vpack.c.b16 %v675, %v674
    %v700 = vpack.c.b16 %v677, %v676
    %v701 = vpack.c.b16 %v679, %v678
    %v702 = vpack.c.b16 %v681, %v680
    %v703 = vpack.c.b16 %v683, %v682
    %v704 = vpack.c.b16 %v685, %v684
    %v705 = vpack.c.b16 %v687, %v686
    %v706 = vpack.c.b16 %v689, %v688
    %v707 = vpack.c.b16 %v691, %v690
    %724 = vmatprep.subr.bf16.mxu0 0
    %725 = vmatpush1.bf16.msra.mxu0 %v699
    %726 = vmatprep.subr.bf16.mxu0 0
    %727 = vmatpush1.bf16.msra.mxu0 %v698
    %728 = vmatprep.subr.bf16.mxu0 0
    %729 = vmatpush1.bf16.msra.mxu0 %v697
    %730 = vmatprep.subr.bf16.mxu0 0
    %731 = vmatpush1.bf16.msra.mxu0 %v696
    %732 = vmatprep.subr.bf16.mxu0 0
    %733 = vmatpush1.bf16.msra.mxu0 %v695
    %734 = vmatprep.subr.bf16.mxu0 0
    %735 = vmatpush1.bf16.msra.mxu0 %v694
    %736 = vmatprep.subr.bf16.mxu0 0
    %737 = vmatpush1.bf16.msra.mxu0 %v693
    %738 = vmatprep.subr.bf16.mxu0 0
    %739 = vmatpush1.bf16.msra.mxu0 %v692
    %740 = vmatprep.subr.bf16.mxu0 0
    %741 = vmatpush2.bf16.msra.mxu0 %v707
    %742 = vmatprep.subr.bf16.mxu0 0
    %743 = vmatpush2.bf16.msra.mxu0 %v706
    %744 = vmatprep.subr.bf16.mxu0 0
    %745 = vmatpush2.bf16.msra.mxu0 %v705
    %746 = vmatprep.subr.bf16.mxu0 0
    %747 = vmatpush2.bf16.msra.mxu0 %v704
    %748 = vmatprep.subr.bf16.mxu0 0
    %749 = vmatpush2.bf16.msra.mxu0 %v703
    %750 = vmatprep.subr.bf16.mxu0 0
    %751 = vmatpush2.bf16.msra.mxu0 %v702
    %752 = vmatprep.subr.bf16.mxu0 0
    %753 = vmatpush2.bf16.msra.mxu0 %v701
    %754 = vmatprep.subr.bf16.mxu0 0
    %755 = vmatpush2.bf16.msra.mxu0 %v700
    %756 = vmatprep.mubr.bf16.mxu0 %v594
    %757 = vmatmul.mubr.bf16.gmra.mxu0 %v588
    %v758 = vpop.f32.mrf.mxu0
    %v759 = vadd.f32 0.0, %v758
    %v760 = vpop.f32.mrf.mxu0
    %v761 = vpop.f32.mrf.mxu0
    %v762 = vpop.f32.mrf.mxu0
    %763 = vdwg.mxu0
    %v764 = vadd.f32 %v592, %v759
    %v766 = vrot.slane %v589, 4
    %s768 = scalar_lea.vmem [#allocation11], 128
    %v769 = vld [vmem:[%s768] sm:$0xf]
    %v770 = vld [vmem:[%s768 + $0x4] sm:$0xf]
    %v771 = vld [vmem:[%s768 + $0x8] sm:$0xf]
    %v772 = vld [vmem:[%s768 + $0xc] sm:$0xf]
    %v773 = vld [vmem:[%s768 + $0x10] sm:$0xf]
    %v774 = vld [vmem:[%s768 + $0x14] sm:$0xf]
    %v775 = vld [vmem:[%s768 + $0x18] sm:$0xf]
    %v776 = vld [vmem:[%s768 + $0x1c] sm:$0xf]
    %v777 = vld [vmem:[%s768 + $0x20] sm:$0xf]
    %v778 = vld [vmem:[%s768 + $0x24] sm:$0xf]
    %v779 = vld [vmem:[%s768 + $0x28] sm:$0xf]
    %v780 = vld [vmem:[%s768 + $0x2c] sm:$0xf]
    %v781 = vld [vmem:[%s768 + $0x30] sm:$0xf]
    %v782 = vld [vmem:[%s768 + $0x34] sm:$0xf]
    %v783 = vld [vmem:[%s768 + $0x38] sm:$0xf]
    %v784 = vld [vmem:[%s768 + $0x3c] sm:$0xf]
    %v785 = vld [vmem:[%s768 + $0x40] sm:$0xf]
    %v786 = vld [vmem:[%s768 + $0x44] sm:$0xf]
    %v787 = vld [vmem:[%s768 + $0x48] sm:$0xf]
    %v788 = vld [vmem:[%s768 + $0x4c] sm:$0xf]
    %v789 = vld [vmem:[%s768 + $0x50] sm:$0xf]
    %v790 = vld [vmem:[%s768 + $0x54] sm:$0xf]
    %v791 = vld [vmem:[%s768 + $0x58] sm:$0xf]
    %v792 = vld [vmem:[%s768 + $0x5c] sm:$0xf]
    %v793 = vld [vmem:[%s768 + $0x60] sm:$0xf]
    %v794 = vld [vmem:[%s768 + $0x64] sm:$0xf]
    %v795 = vld [vmem:[%s768 + $0x68] sm:$0xf]
    %v796 = vld [vmem:[%s768 + $0x6c] sm:$0xf]
    %v797 = vld [vmem:[%s768 + $0x70] sm:$0xf]
    %v798 = vld [vmem:[%s768 + $0x74] sm:$0xf]
    %v799 = vld [vmem:[%s768 + $0x78] sm:$0xf]
    %v800 = vld [vmem:[%s768 + $0x7c] sm:$0xf]
    %v833 = vunpack.c.l.b16 %v769
    %v834 = vunpack.c.l.b16 %v770
    %v835 = vunpack.c.l.b16 %v771
    %v836 = vunpack.c.l.b16 %v772
    %v837 = vunpack.c.l.b16 %v773
    %v838 = vunpack.c.l.b16 %v774
    %v839 = vunpack.c.l.b16 %v775
    %v840 = vunpack.c.l.b16 %v776
    %v841 = vunpack.c.l.b16 %v777
    %v842 = vunpack.c.l.b16 %v778
    %v843 = vunpack.c.l.b16 %v779
    %v844 = vunpack.c.l.b16 %v780
    %v845 = vunpack.c.l.b16 %v781
    %v846 = vunpack.c.l.b16 %v782
    %v847 = vunpack.c.l.b16 %v783
    %v848 = vunpack.c.l.b16 %v784
    %v849 = vunpack.c.l.b16 %v785
    %v850 = vunpack.c.l.b16 %v786
    %v851 = vunpack.c.l.b16 %v787
    %v852 = vunpack.c.l.b16 %v788
    %v853 = vunpack.c.l.b16 %v789
    %v854 = vunpack.c.l.b16 %v790
    %v855 = vunpack.c.l.b16 %v791
    %v856 = vunpack.c.l.b16 %v792
    %v857 = vunpack.c.l.b16 %v793
    %v858 = vunpack.c.l.b16 %v794
    %v859 = vunpack.c.l.b16 %v795
    %v860 = vunpack.c.l.b16 %v796
    %v861 = vunpack.c.l.b16 %v797
    %v862 = vunpack.c.l.b16 %v798
    %v863 = vunpack.c.l.b16 %v799
    %v864 = vunpack.c.l.b16 %v800
    %v865 = vpack.c.b16 %v834, %v833
    %v866 = vpack.c.b16 %v836, %v835
    %v867 = vpack.c.b16 %v838, %v837
    %v868 = vpack.c.b16 %v840, %v839
    %v869 = vpack.c.b16 %v842, %v841
    %v870 = vpack.c.b16 %v844, %v843
    %v871 = vpack.c.b16 %v846, %v845
    %v872 = vpack.c.b16 %v848, %v847
    %v873 = vpack.c.b16 %v850, %v849
    %v874 = vpack.c.b16 %v852, %v851
    %v875 = vpack.c.b16 %v854, %v853
    %v876 = vpack.c.b16 %v856, %v855
    %v877 = vpack.c.b16 %v858, %v857
    %v878 = vpack.c.b16 %v860, %v859
    %v879 = vpack.c.b16 %v862, %v861
    %v880 = vpack.c.b16 %v864, %v863
    %897 = vmatprep.subr.bf16.mxu0 0
    %898 = vmatpush1.bf16.msra.mxu0 %v872
    %899 = vmatprep.subr.bf16.mxu0 0
    %900 = vmatpush1.bf16.msra.mxu0 %v871
    %901 = vmatprep.subr.bf16.mxu0 0
    %902 = vmatpush1.bf16.msra.mxu0 %v870
    %903 = vmatprep.subr.bf16.mxu0 0
    %904 = vmatpush1.bf16.msra.mxu0 %v869
    %905 = vmatprep.subr.bf16.mxu0 0
    %906 = vmatpush1.bf16.msra.mxu0 %v868
    %907 = vmatprep.subr.bf16.mxu0 0
    %908 = vmatpush1.bf16.msra.mxu0 %v867
    %909 = vmatprep.subr.bf16.mxu0 0
    %910 = vmatpush1.bf16.msra.mxu0 %v866
    %911 = vmatprep.subr.bf16.mxu0 0
    %912 = vmatpush1.bf16.msra.mxu0 %v865
    %913 = vmatprep.subr.bf16.mxu0 0
    %914 = vmatpush2.bf16.msra.mxu0 %v880
    %915 = vmatprep.subr.bf16.mxu0 0
    %916 = vmatpush2.bf16.msra.mxu0 %v879
    %917 = vmatprep.subr.bf16.mxu0 0
    %918 = vmatpush2.bf16.msra.mxu0 %v878
    %919 = vmatprep.subr.bf16.mxu0 0
    %920 = vmatpush2.bf16.msra.mxu0 %v877
    %921 = vmatprep.subr.bf16.mxu0 0
    %922 = vmatpush2.bf16.msra.mxu0 %v876
    %923 = vmatprep.subr.bf16.mxu0 0
    %924 = vmatpush2.bf16.msra.mxu0 %v875
    %925 = vmatprep.subr.bf16.mxu0 0
    %926 = vmatpush2.bf16.msra.mxu0 %v874
    %927 = vmatprep.subr.bf16.mxu0 0
    %928 = vmatpush2.bf16.msra.mxu0 %v873
    %929 = vmatprep.mubr.bf16.mxu0 %v766
    %930 = vmatmul.mubr.bf16.gmra.mxu0 %v589
    %v931 = vpop.f32.mrf.mxu0
    %v932 = vadd.f32 0.0, %v931
    %v933 = vpop.f32.mrf.mxu0
    %v934 = vpop.f32.mrf.mxu0
    %v935 = vpop.f32.mrf.mxu0
    %936 = vdwg.mxu0
    %v937 = vadd.f32 %v764, %v932
    %v939 = vrot.slane %v590, 4
    %s941 = scalar_lea.vmem [#allocation11], 256
    %v942 = vld [vmem:[%s941] sm:$0xf]
    %v943 = vld [vmem:[%s941 + $0x4] sm:$0xf]
    %v944 = vld [vmem:[%s941 + $0x8] sm:$0xf]
    %v945 = vld [vmem:[%s941 + $0xc] sm:$0xf]
    %v946 = vld [vmem:[%s941 + $0x10] sm:$0xf]
    %v947 = vld [vmem:[%s941 + $0x14] sm:$0xf]
    %v948 = vld [vmem:[%s941 + $0x18] sm:$0xf]
    %v949 = vld [vmem:[%s941 + $0x1c] sm:$0xf]
    %v950 = vld [vmem:[%s941 + $0x20] sm:$0xf]
    %v951 = vld [vmem:[%s941 + $0x24] sm:$0xf]
    %v952 = vld [vmem:[%s941 + $0x28] sm:$0xf]
    %v953 = vld [vmem:[%s941 + $0x2c] sm:$0xf]
    %v954 = vld [vmem:[%s941 + $0x30] sm:$0xf]
    %v955 = vld [vmem:[%s941 + $0x34] sm:$0xf]
    %v956 = vld [vmem:[%s941 + $0x38] sm:$0xf]
    %v957 = vld [vmem:[%s941 + $0x3c] sm:$0xf]
    %v958 = vld [vmem:[%s941 + $0x40] sm:$0xf]
    %v959 = vld [vmem:[%s941 + $0x44] sm:$0xf]
    %v960 = vld [vmem:[%s941 + $0x48] sm:$0xf]
    %v961 = vld [vmem:[%s941 + $0x4c] sm:$0xf]
    %v962 = vld [vmem:[%s941 + $0x50] sm:$0xf]
    %v963 = vld [vmem:[%s941 + $0x54] sm:$0xf]
    %v964 = vld [vmem:[%s941 + $0x58] sm:$0xf]
    %v965 = vld [vmem:[%s941 + $0x5c] sm:$0xf]
    %v966 = vld [vmem:[%s941 + $0x60] sm:$0xf]
    %v967 = vld [vmem:[%s941 + $0x64] sm:$0xf]
    %v968 = vld [vmem:[%s941 + $0x68] sm:$0xf]
    %v969 = vld [vmem:[%s941 + $0x6c] sm:$0xf]
    %v970 = vld [vmem:[%s941 + $0x70] sm:$0xf]
    %v971 = vld [vmem:[%s941 + $0x74] sm:$0xf]
    %v972 = vld [vmem:[%s941 + $0x78] sm:$0xf]
    %v973 = vld [vmem:[%s941 + $0x7c] sm:$0xf]
    %v1006 = vunpack.c.l.b16 %v942
    %v1007 = vunpack.c.l.b16 %v943
    %v1008 = vunpack.c.l.b16 %v944
    %v1009 = vunpack.c.l.b16 %v945
    %v1010 = vunpack.c.l.b16 %v946
    %v1011 = vunpack.c.l.b16 %v947
    %v1012 = vunpack.c.l.b16 %v948
    %v1013 = vunpack.c.l.b16 %v949
    %v1014 = vunpack.c.l.b16 %v950
    %v1015 = vunpack.c.l.b16 %v951
    %v1016 = vunpack.c.l.b16 %v952
    %v1017 = vunpack.c.l.b16 %v953
    %v1018 = vunpack.c.l.b16 %v954
    %v1019 = vunpack.c.l.b16 %v955
    %v1020 = vunpack.c.l.b16 %v956
    %v1021 = vunpack.c.l.b16 %v957
    %v1022 = vunpack.c.l.b16 %v958
    %v1023 = vunpack.c.l.b16 %v959
    %v1024 = vunpack.c.l.b16 %v960
    %v1025 = vunpack.c.l.b16 %v961
    %v1026 = vunpack.c.l.b16 %v962
    %v1027 = vunpack.c.l.b16 %v963
    %v1028 = vunpack.c.l.b16 %v964
    %v1029 = vunpack.c.l.b16 %v965
    %v1030 = vunpack.c.l.b16 %v966
    %v1031 = vunpack.c.l.b16 %v967
    %v1032 = vunpack.c.l.b16 %v968
    %v1033 = vunpack.c.l.b16 %v969
    %v1034 = vunpack.c.l.b16 %v970
    %v1035 = vunpack.c.l.b16 %v971
    %v1036 = vunpack.c.l.b16 %v972
    %v1037 = vunpack.c.l.b16 %v973
    %v1038 = vpack.c.b16 %v1007, %v1006
    %v1039 = vpack.c.b16 %v1009, %v1008
    %v1040 = vpack.c.b16 %v1011, %v1010
    %v1041 = vpack.c.b16 %v1013, %v1012
    %v1042 = vpack.c.b16 %v1015, %v1014
    %v1043 = vpack.c.b16 %v1017, %v1016
    %v1044 = vpack.c.b16 %v1019, %v1018
    %v1045 = vpack.c.b16 %v1021, %v1020
    %v1046 = vpack.c.b16 %v1023, %v1022
    %v1047 = vpack.c.b16 %v1025, %v1024
    %v1048 = vpack.c.b16 %v1027, %v1026
    %v1049 = vpack.c.b16 %v1029, %v1028
    %v1050 = vpack.c.b16 %v1031, %v1030
    %v1051 = vpack.c.b16 %v1033, %v1032
    %v1052 = vpack.c.b16 %v1035, %v1034
    %v1053 = vpack.c.b16 %v1037, %v1036
    %1070 = vmatprep.subr.bf16.mxu0 0
    %1071 = vmatpush1.bf16.msra.mxu0 %v1045
    %1072 = vmatprep.subr.bf16.mxu0 0
    %1073 = vmatpush1.bf16.msra.mxu0 %v1044
    %1074 = vmatprep.subr.bf16.mxu0 0
    %1075 = vmatpush1.bf16.msra.mxu0 %v1043
    %1076 = vmatprep.subr.bf16.mxu0 0
    %1077 = vmatpush1.bf16.msra.mxu0 %v1042
    %1078 = vmatprep.subr.bf16.mxu0 0
    %1079 = vmatpush1.bf16.msra.mxu0 %v1041
    %1080 = vmatprep.subr.bf16.mxu0 0
    %1081 = vmatpush1.bf16.msra.mxu0 %v1040
    %1082 = vmatprep.subr.bf16.mxu0 0
    %1083 = vmatpush1.bf16.msra.mxu0 %v1039
    %1084 = vmatprep.subr.bf16.mxu0 0
    %1085 = vmatpush1.bf16.msra.mxu0 %v1038
    %1086 = vmatprep.subr.bf16.mxu0 0
    %1087 = vmatpush2.bf16.msra.mxu0 %v1053
    %1088 = vmatprep.subr.bf16.mxu0 0
    %1089 = vmatpush2.bf16.msra.mxu0 %v1052
    %1090 = vmatprep.subr.bf16.mxu0 0
    %1091 = vmatpush2.bf16.msra.mxu0 %v1051
    %1092 = vmatprep.subr.bf16.mxu0 0
    %1093 = vmatpush2.bf16.msra.mxu0 %v1050
    %1094 = vmatprep.subr.bf16.mxu0 0
    %1095 = vmatpush2.bf16.msra.mxu0 %v1049
    %1096 = vmatprep.subr.bf16.mxu0 0
    %1097 = vmatpush2.bf16.msra.mxu0 %v1048
    %1098 = vmatprep.subr.bf16.mxu0 0
    %1099 = vmatpush2.bf16.msra.mxu0 %v1047
    %1100 = vmatprep.subr.bf16.mxu0 0
    %1101 = vmatpush2.bf16.msra.mxu0 %v1046
    %1102 = vmatprep.mubr.bf16.mxu0 %v939
    %1103 = vmatmul.mubr.bf16.gmra.mxu0 %v590
    %v1104 = vpop.f32.mrf.mxu0
    %v1105 = vadd.f32 0.0, %v1104
    %v1106 = vpop.f32.mrf.mxu0
    %v1107 = vpop.f32.mrf.mxu0
    %v1108 = vpop.f32.mrf.mxu0
    %1109 = vdwg.mxu0
    %v1110 = vadd.f32 %v937, %v1105
    %v1112 = vrot.slane %v591, 4
    %s1114 = scalar_lea.vmem [#allocation11], 384
    %v1115 = vld [vmem:[%s1114] sm:$0xf]
    %v1116 = vld [vmem:[%s1114 + $0x4] sm:$0xf]
    %v1117 = vld [vmem:[%s1114 + $0x8] sm:$0xf]
    %v1118 = vld [vmem:[%s1114 + $0xc] sm:$0xf]
    %v1119 = vld [vmem:[%s1114 + $0x10] sm:$0xf]
    %v1120 = vld [vmem:[%s1114 + $0x14] sm:$0xf]
    %v1121 = vld [vmem:[%s1114 + $0x18] sm:$0xf]
    %v1122 = vld [vmem:[%s1114 + $0x1c] sm:$0xf]
    %v1123 = vld [vmem:[%s1114 + $0x20] sm:$0xf]
    %v1124 = vld [vmem:[%s1114 + $0x24] sm:$0xf]
    %v1125 = vld [vmem:[%s1114 + $0x28] sm:$0xf]
    %v1126 = vld [vmem:[%s1114 + $0x2c] sm:$0xf]
    %v1127 = vld [vmem:[%s1114 + $0x30] sm:$0xf]
    %v1128 = vld [vmem:[%s1114 + $0x34] sm:$0xf]
    %v1129 = vld [vmem:[%s1114 + $0x38] sm:$0xf]
    %v1130 = vld [vmem:[%s1114 + $0x3c] sm:$0xf]
    %v1131 = vld [vmem:[%s1114 + $0x40] sm:$0xf]
    %v1132 = vld [vmem:[%s1114 + $0x44] sm:$0xf]
    %v1133 = vld [vmem:[%s1114 + $0x48] sm:$0xf]
    %v1134 = vld [vmem:[%s1114 + $0x4c] sm:$0xf]
    %v1135 = vld [vmem:[%s1114 + $0x50] sm:$0xf]
    %v1136 = vld [vmem:[%s1114 + $0x54] sm:$0xf]
    %v1137 = vld [vmem:[%s1114 + $0x58] sm:$0xf]
    %v1138 = vld [vmem:[%s1114 + $0x5c] sm:$0xf]
    %v1139 = vld [vmem:[%s1114 + $0x60] sm:$0xf]
    %v1140 = vld [vmem:[%s1114 + $0x64] sm:$0xf]
    %v1141 = vld [vmem:[%s1114 + $0x68] sm:$0xf]
    %v1142 = vld [vmem:[%s1114 + $0x6c] sm:$0xf]
    %v1143 = vld [vmem:[%s1114 + $0x70] sm:$0xf]
    %v1144 = vld [vmem:[%s1114 + $0x74] sm:$0xf]
    %v1145 = vld [vmem:[%s1114 + $0x78] sm:$0xf]
    %v1146 = vld [vmem:[%s1114 + $0x7c] sm:$0xf]
    %v1179 = vunpack.c.l.b16 %v1115
    %v1180 = vunpack.c.l.b16 %v1116
    %v1181 = vunpack.c.l.b16 %v1117
    %v1182 = vunpack.c.l.b16 %v1118
    %v1183 = vunpack.c.l.b16 %v1119
    %v1184 = vunpack.c.l.b16 %v1120
    %v1185 = vunpack.c.l.b16 %v1121
    %v1186 = vunpack.c.l.b16 %v1122
    %v1187 = vunpack.c.l.b16 %v1123
    %v1188 = vunpack.c.l.b16 %v1124
    %v1189 = vunpack.c.l.b16 %v1125
    %v1190 = vunpack.c.l.b16 %v1126
    %v1191 = vunpack.c.l.b16 %v1127
    %v1192 = vunpack.c.l.b16 %v1128
    %v1193 = vunpack.c.l.b16 %v1129
    %v1194 = vunpack.c.l.b16 %v1130
    %v1195 = vunpack.c.l.b16 %v1131
    %v1196 = vunpack.c.l.b16 %v1132
    %v1197 = vunpack.c.l.b16 %v1133
    %v1198 = vunpack.c.l.b16 %v1134
    %v1199 = vunpack.c.l.b16 %v1135
    %v1200 = vunpack.c.l.b16 %v1136
    %v1201 = vunpack.c.l.b16 %v1137
    %v1202 = vunpack.c.l.b16 %v1138
    %v1203 = vunpack.c.l.b16 %v1139
    %v1204 = vunpack.c.l.b16 %v1140
    %v1205 = vunpack.c.l.b16 %v1141
    %v1206 = vunpack.c.l.b16 %v1142
    %v1207 = vunpack.c.l.b16 %v1143
    %v1208 = vunpack.c.l.b16 %v1144
    %v1209 = vunpack.c.l.b16 %v1145
    %v1210 = vunpack.c.l.b16 %v1146
    %v1211 = vpack.c.b16 %v1180, %v1179
    %v1212 = vpack.c.b16 %v1182, %v1181
    %v1213 = vpack.c.b16 %v1184, %v1183
    %v1214 = vpack.c.b16 %v1186, %v1185
    %v1215 = vpack.c.b16 %v1188, %v1187
    %v1216 = vpack.c.b16 %v1190, %v1189
    %v1217 = vpack.c.b16 %v1192, %v1191
    %v1218 = vpack.c.b16 %v1194, %v1193
    %v1219 = vpack.c.b16 %v1196, %v1195
    %v1220 = vpack.c.b16 %v1198, %v1197
    %v1221 = vpack.c.b16 %v1200, %v1199
    %v1222 = vpack.c.b16 %v1202, %v1201
    %v1223 = vpack.c.b16 %v1204, %v1203
    %v1224 = vpack.c.b16 %v1206, %v1205
    %v1225 = vpack.c.b16 %v1208, %v1207
    %v1226 = vpack.c.b16 %v1210, %v1209
    %1243 = vmatprep.subr.bf16.mxu0 0
    %1244 = vmatpush1.bf16.msra.mxu0 %v1218
    %1245 = vmatprep.subr.bf16.mxu0 0
    %1246 = vmatpush1.bf16.msra.mxu0 %v1217
    %1247 = vmatprep.subr.bf16.mxu0 0
    %1248 = vmatpush1.bf16.msra.mxu0 %v1216
    %1249 = vmatprep.subr.bf16.mxu0 0
    %1250 = vmatpush1.bf16.msra.mxu0 %v1215
    %1251 = vmatprep.subr.bf16.mxu0 0
    %1252 = vmatpush1.bf16.msra.mxu0 %v1214
    %1253 = vmatprep.subr.bf16.mxu0 0
    %1254 = vmatpush1.bf16.msra.mxu0 %v1213
    %1255 = vmatprep.subr.bf16.mxu0 0
    %1256 = vmatpush1.bf16.msra.mxu0 %v1212
    %1257 = vmatprep.subr.bf16.mxu0 0
    %1258 = vmatpush1.bf16.msra.mxu0 %v1211
    %1259 = vmatprep.subr.bf16.mxu0 0
    %1260 = vmatpush2.bf16.msra.mxu0 %v1226
    %1261 = vmatprep.subr.bf16.mxu0 0
    %1262 = vmatpush2.bf16.msra.mxu0 %v1225
    %1263 = vmatprep.subr.bf16.mxu0 0
    %1264 = vmatpush2.bf16.msra.mxu0 %v1224
    %1265 = vmatprep.subr.bf16.mxu0 0
    %1266 = vmatpush2.bf16.msra.mxu0 %v1223
    %1267 = vmatprep.subr.bf16.mxu0 0
    %1268 = vmatpush2.bf16.msra.mxu0 %v1222
    %1269 = vmatprep.subr.bf16.mxu0 0
    %1270 = vmatpush2.bf16.msra.mxu0 %v1221
    %1271 = vmatprep.subr.bf16.mxu0 0
    %1272 = vmatpush2.bf16.msra.mxu0 %v1220
    %1273 = vmatprep.subr.bf16.mxu0 0
    %1274 = vmatpush2.bf16.msra.mxu0 %v1219
    %1275 = vmatprep.mubr.bf16.mxu0 %v1112
    %1276 = vmatmul.mubr.bf16.gmra.mxu0 %v591
    %v1277 = vpop.f32.mrf.mxu0
    %v1278 = vadd.f32 0.0, %v1277
    %v1279 = vpop.f32.mrf.mxu0
    %v1280 = vpop.f32.mrf.mxu0
    %v1281 = vpop.f32.mrf.mxu0
    %1282 = vdwg.mxu0
    %v1283 = vadd.f32 %v1110, %v1278
    %1284 = vst [vmem:[#allocation2] sm:$0xff] %v1283
    // Predicated region
    $region62: #{tpu_custom_call.1} parent=1 // pred_check
      %p1285 = pneg %p102
    $region63: #{tpu_custom_call.1} parent=1 // pred_check_branch
      %1287 = sbr.rel (%p1285) target = $region65
    $region64: #{tpu_custom_call.1} parent=1 // pred_region
      %v1288 = vld [vmem:[#allocation2] sm:$0xff]
      %v1289 = vld [vmem:[%s8] sm:$0x1]
      %v1291 = vlaneseq
      %v1292 = vshrl.u32 %v1291, 7
      %v1293 = vsub.s32 0, %v1292
      %v1294 = vrot.slane %v1289, %v1293
      %v1296 = vadd.f32 %v1288, %v1294
      %1297 = vst [vmem:[#allocation12] sm:$0xff] %v1296
    $region65: #{tpu_custom_call.1} parent=1 // pred_fallthru
      _
    // Predicated region
    $region66: #{tpu_custom_call.1} parent=1 // pred_check
      _
    $region67: #{tpu_custom_call.1} parent=1 // pred_check_branch
      %1299 = sbr.rel (0) target = $region69
    $region68: #{tpu_custom_call.1} parent=1 // pred_region
      %s1301 = ssub.s32 128, 128
      %1302 = vsyncadd [#allocation5], %s1301
      %s1304 = sshll.u32 [#allocation12], 4
      %s1305 = int_to_ptr.vmem [resolvable:$true] %s1304
      %1307 = dma.vmem_to_hbm [thread:$0]  %s1305, 128, %s9, [#allocation5]
    $region69: #{tpu_custom_call.1} parent=1 // pred_fallthru
      _
    // Predicated region
    $region70: #{tpu_custom_call.1} parent=1 // pred_check
      _
    $region71: #{tpu_custom_call.1} parent=1 // pred_check_branch
      %1309 = sbr.rel (0) target = $region73
    $region72: #{tpu_custom_call.1} parent=1 // pred_region
      %1310 = dma.done [#allocation5], 128
    $region73: #{tpu_custom_call.1} parent=1 // pred_fallthru
      _
    %1311 = vsyncpa [#allocation4], 1
    %1312 = vsyncpa [#allocation7], 1
    %1313 = vsyncpa [#allocation10], 1
    %1314 = vsyncpa [#allocation5], 1

</llo_original>
